<compile_context>
chip_gen: v7x
topology: tpu7x:2x2x1
jax: 0.10.0
libtpu: 0.0.40
codegen_flags: <defaults>
</compile_context>

<pallas_src>
import math

import jax
import jax.numpy as jnp
import numpy as np
from jax.experimental import pallas as pl
from jax.experimental.pallas import tpu as pltpu

# ---- configuration consistent with PitchPredictor (defaults scaled down) ----
INTER_CHANNELS = 32       # module default 192
GIN_CHANNELS = 32         # module default 192
NUM_LAYERS = 2            # module default 8
NUM_CLASSES = 128         # module default 512
CLASSES_PER_OCTAVE = 48.0
MIN_FREQUENCY = 20.0
KERNEL_SIZE = 7
PAD = (KERNEL_SIZE - 1) // 2      # get_padding(7, 1) == 3
TOPK = 4
LN_EPS = 1e-5
LOG2 = math.log(2.0)

DEFAULT_TILE_T = 512              # rows per tile; 512 fits v5e/v6e/v7x budgets
F0_W = 8                          # lanes used for the f0 output slab
LOGITS_DTYPE = jnp.bfloat16       # halves the largest HBM write
SPAD = 8                          # sublane-aligned scratch border (>= PAD)

# torch mapping: gin_w = g_in.weight[:, :, 0].T, gin_b = g_in.bias[None];
# c2_w/c3_w/proj_w are transposed 1x1-conv weights; dw_w[l, k, c] =
# layers[l].c1.weight[c, 0, k]; ln_g/ln_b are the channel-LayerNorm affine.
PARAM_ORDER = ('gin_w', 'gin_b', 'dw_w', 'dw_b', 'ln_g', 'ln_b',
               'c2_w', 'c2_b', 'c3_w', 'c3_b', 'proj_w', 'proj_b')


def _round_up(n, m):
    return ((n + m - 1) // m) * m


def _vmem_limit_bytes():
    # v7x: 64 MiB / TensorCore, v5e/v6e: 128 MiB.  Leave headroom for internal
    # scratch + double-buffered blocks.  Falls back to a v7x-safe 48 MiB.
    try:
        cap = int(pltpu.get_tpu_info().vmem_capacity_bytes)
    except Exception:
        cap = 64 * 1024 * 1024
    return min(cap * 3 // 4, 96 * 1024 * 1024)


def _make_pitch_kernel(*, seq_len, tile_t, halo, num_layers):
    tw = tile_t + 2 * halo                      # rows computed per tile

    def kernel(xw_ref, gw_ref,
               gin_w_ref, gin_b_ref, dw_w_ref, dw_b_ref,
               ln_g_ref, ln_b_ref, c2_w_ref, c2_b_ref,
               c3_w_ref, c3_b_ref, proj_w_ref, proj_b_ref,
               logits_ref, f0_ref, xs_ref):
        f32, bf16 = jnp.float32, jnp.bfloat16
        C = xw_ref.shape[-1]
        r = pl.program_id(1)

        # Row-validity mask: global sequence position of window row i is
        # r*tile_t - halo + i; positions outside [0, seq_len) are the conv's
        # zero padding and must be re-zeroed before every layer's conv.
        row = jax.lax.broadcasted_iota(jnp.int32, (tw, 1), 0)
        pos = row + (r * tile_t - halo)
        valid = jnp.logical_and(pos >= 0, pos < seq_len)

        # Zero the scratch alignment borders once per tile (keeps the window
        # edge rows finite; they never reach the interior: halo >= L*PAD).
        xs_ref[:SPAD, :] = jnp.zeros((SPAD, C), f32)
        xs_ref[SPAD + tw:, :] = jnp.zeros((SPAD, C), f32)

        # --- g_in (1x1 conv): bf16 MXU operands, f32 accumulation ---
        x = xw_ref[...]
        x = x + jnp.dot(gw_ref[...], gin_w_ref[...],
                        preferred_element_type=f32) + gin_b_ref[...]

        # --- residual stack (static unroll; use lax.fori_loop at L=8 if
        #     bundle dumps show vreg spills) ---
        for l in range(num_layers):
            # conv zero padding outside the sequence (where, not multiply, so
            # uninitialized/NaN halo data can never leak through a 0*NaN).
            x = jnp.where(valid, x, 0.0)
            res = x

            # c1: depthwise Conv1d(k=7, pad=3, groups=C) -- one aligned
            # interior store + 6 static shifted loads from the padded scratch.
            xs_ref[SPAD:SPAD + tw, :] = x
            w_dw = dw_w_ref[l]                               # (K, C) f32
            y = x * w_dw[PAD:PAD + 1, :] + dw_b_ref[l]       # centre tap
            for k in range(KERNEL_SIZE):
                if k == PAD:
                    continue
                d = k - PAD
                y = y + xs_ref[SPAD + d:SPAD + d + tw, :] * w_dw[k:k + 1, :]

            # LayerNorm over the channel (lane) axis.
            mean = jnp.mean(y, axis=-1, keepdims=True)
            var = jnp.mean((y - mean) ** 2, axis=-1, keepdims=True)
            y = (y - mean) * jax.lax.rsqrt(var + LN_EPS)
            y = y * ln_g_ref[l] + ln_b_ref[l]

            # c2 (1x1, MXU) + leaky_relu(0.1)
            y = jnp.dot(y.astype(bf16), c2_w_ref[l],
                        preferred_element_type=f32) + c2_b_ref[l]
            y = jnp.maximum(y, 0.1 * y)

            # c3 (1x1, MXU) + residual
            y = jnp.dot(y.astype(bf16), c3_w_ref[l],
                        preferred_element_type=f32) + c3_b_ref[l]
            x = y + res

        # --- proj on the interior rows only (halo rows are discarded) ---
        x_int = x[halo:halo + tile_t, :]
        logits = jnp.dot(x_int.astype(bf16), proj_w_ref[...],
                         preferred_element_type=f32) + proj_b_ref[...]
        logits_ref[...] = logits.astype(logits_ref.dtype)

        # --- decode(): top-4 over classes, softmax, id2freq, weighted sum ---
        # (On v7x with very large tiles this tail should be chunked over row
        #  sub-blocks; at TILE_T<=512 the transients are small.)
        nc = logits.shape[-1]
        cls = jax.lax.broadcasted_iota(jnp.int32, logits.shape, 1)
        work = logits
        vals, idxs = [], []
        for _ in range(TOPK):
            m = jnp.max(work, axis=-1, keepdims=True)
            idx = jnp.min(jnp.where(work == m, cls, nc),
                          axis=-1, keepdims=True)
            vals.append(m)
            idxs.append(idx)
            work = jnp.where(cls == idx, -jnp.inf, work)

        # Softmax over the 4 top values; vals[0] is the max so exp(0) == 1.
        exps = [jnp.ones_like(vals[0])] + [jnp.exp(v - vals[0])
                                           for v in vals[1:]]
        denom = exps[0]
        for e in exps[1:]:
            denom = denom + e

        acc = jnp.zeros_like(vals[0])
        for e, idx in zip(exps, idxs):
            freq = MIN_FREQUENCY * jnp.exp(idx.astype(f32) *
                                           (LOG2 / CLASSES_PER_OCTAVE))
            freq = jnp.where(freq <= MIN_FREQUENCY, 0.0, freq)
            acc = acc + e * freq
        f0 = acc / denom                      # exact softmax normalization
        f0 = jnp.where(f0 <= MIN_FREQUENCY, 0.0, f0)
        f0_ref[...] = jnp.broadcast_to(f0, f0_ref.shape)

    return kernel


def _window_tiles(a, tile_t, halo, n_tiles):
    """(B, T, C) -> (B, n_tiles, tile_t + 2*halo, C) with zero padding.
    Window r covers sequence positions [r*tile_t - halo, r*tile_t + tile_t +
    halo).  (Production: replace with in-kernel manual DMA of overlapping
    windows to avoid this extra HBM pass.)"""
    B, T, C = a.shape
    Tp = n_tiles * tile_t
    a_pad = jnp.pad(a, ((0, 0), (halo, halo + Tp - T), (0, 0)))
    wins = [a_pad[:, r * tile_t:r * tile_t + tile_t + 2 * halo, :]
            for r in range(n_tiles)]
    return jnp.stack(wins, axis=1)


def _resident_spec(arr):
    """Full-array block, constant index map -> stays VMEM-resident across the
    whole grid (no per-step re-DMA of the weights)."""
    zeros = (0,) * arr.ndim
    return pl.BlockSpec(arr.shape, lambda *_: zeros)


def pitch_predictor_forward(x_btc, g_btc, params, *, tile_t=None):
    """Channels-last API.  x_btc: (B, T, C), g_btc: (B, T, Cg) (the PyTorch
    (B, C, T) tensors transposed).  Returns (f0, f0_logits) with shapes
    (B, T, 1) f32 and (B, T, num_classes) LOGITS_DTYPE."""
    B, T, C = x_btc.shape
    Cg = g_btc.shape[-1]
    if tile_t is None:
        tile_t = min(DEFAULT_TILE_T, _round_up(T, 8))
    tile_t = max(8, _round_up(int(tile_t), 8))
    n_tiles = -(-T // tile_t)
    Tp = n_tiles * tile_t
    halo = _round_up(NUM_LAYERS * PAD, 8)     # fused-through-depth halo
    tw = tile_t + 2 * halo

    xw = _window_tiles(x_btc.astype(jnp.float32), tile_t, halo, n_tiles)
    gw = _window_tiles(g_btc.astype(jnp.bfloat16), tile_t, halo, n_tiles)

    weights = [params[k] for k in PARAM_ORDER]
    kernel = _make_pitch_kernel(seq_len=T, tile_t=tile_t, halo=halo,
                                num_layers=NUM_LAYERS)

    logits_t, f0_t = pl.pallas_call(
        kernel,
        grid=(B, n_tiles),
        in_specs=[
            pl.BlockSpec((None, None, tw, C), lambda b, r: (b, r, 0, 0)),
            pl.BlockSpec((None, None, tw, Cg), lambda b, r: (b, r, 0, 0)),
            *[_resident_spec(w) for w in weights],
        ],
        out_specs=(
            pl.BlockSpec((None, None, tile_t, NUM_CLASSES),
                         lambda b, r: (b, r, 0, 0)),
            pl.BlockSpec((None, None, tile_t, F0_W),
                         lambda b, r: (b, r, 0, 0)),
        ),
        out_shape=(
            jax.ShapeDtypeStruct((B, n_tiles, tile_t, NUM_CLASSES),
                                 LOGITS_DTYPE),
            jax.ShapeDtypeStruct((B, n_tiles, tile_t, F0_W), jnp.float32),
        ),
        scratch_shapes=[pltpu.VMEM((tw + 2 * SPAD, C), jnp.float32)],
        compiler_params=pltpu.CompilerParams(
            dimension_semantics=("parallel", "parallel"),
            vmem_limit_bytes=_vmem_limit_bytes()),
    )(xw, gw, *weights)

    logits = logits_t.reshape(B, Tp, NUM_CLASSES)[:, :T, :]
    f0 = f0_t[..., :1].reshape(B, Tp, 1)[:, :T, :]
    return f0, logits


def pitch_predictor_forward_nct(x_nct, g_nct, params, **kw):
    """Compatibility wrapper for the PyTorch Conv1d layout: (B, C, T) in,
    (B, 1, T) / (B, num_classes, T) out."""
    f0, logits = pitch_predictor_forward(
        jnp.swapaxes(x_nct, 1, 2), jnp.swapaxes(g_nct, 1, 2), params, **kw)
    return jnp.swapaxes(f0, 1, 2), jnp.swapaxes(logits, 1, 2)


def init_params(key):
    """Deterministic synthetic parameters.  Matmul weights in bf16 (MXU
    operands, f32 accumulation); elementwise-path params in f32 (v5e-safe)."""
    C, Cg, L, NC = INTER_CHANNELS, GIN_CHANNELS, NUM_LAYERS, NUM_CLASSES
    ks = jax.random.split(key, 12)
    bf16 = jnp.bfloat16

    def n(k, shape, s=0.1, dtype=jnp.float32):
        return (s * jax.random.normal(k, shape, jnp.float32)).astype(dtype)

    return {
        'gin_w': n(ks[0], (Cg, C), dtype=bf16),
        'gin_b': n(ks[1], (1, C)),
        'dw_w': n(ks[2], (L, KERNEL_SIZE, C)),
        'dw_b': n(ks[3], (L, 1, C)),
        'ln_g': 1.0 + n(ks[4], (L, 1, C)),
        'ln_b': n(ks[5], (L, 1, C)),
        'c2_w': n(ks[6], (L, C, C), dtype=bf16),
        'c2_b': n(ks[7], (L, 1, C)),
        'c3_w': n(ks[8], (L, C, C), dtype=bf16),
        'c3_b': n(ks[9], (L, 1, C)),
        'proj_w': n(ks[10], (C, NC), dtype=bf16),
        'proj_b': n(ks[11], (1, NC)),
    }


def reference_forward(x_btc, g_btc, p):
    """Pure-JAX reference mirroring the PyTorch forward semantics."""
    f32, bf16 = jnp.float32, jnp.bfloat16
    x = x_btc.astype(f32)
    g = g_btc.astype(f32)
    B, T, C = x.shape
    x = x + jnp.einsum('btg,gc->btc', g.astype(bf16), p['gin_w'],
                       preferred_element_type=f32) + p['gin_b']
    for l in range(NUM_LAYERS):
        res = x
        xpad = jnp.pad(x, ((0, 0), (PAD, PAD), (0, 0)))
        y = jnp.zeros_like(x)
        for k in range(KERNEL_SIZE):
            y = y + xpad[:, k:k + T, :] * p['dw_w'][l, k][None, None, :]
        y = y + p['dw_b'][l]
        mean = y.mean(-1, keepdims=True)
        var = ((y - mean) ** 2).mean(-1, keepdims=True)
        y = (y - mean) * jax.lax.rsqrt(var + LN_EPS)
        y = y * p['ln_g'][l] + p['ln_b'][l]
        y = jnp.einsum('btc,cd->btd', y.astype(bf16), p['c2_w'][l],
                       preferred_element_type=f32) + p['c2_b'][l]
        y = jnp.where(y > 0, y, 0.1 * y)
        y = jnp.einsum('btc,cd->btd', y.astype(bf16), p['c3_w'][l],
                       preferred_element_type=f32) + p['c3_b'][l]
        x = y + res
    logits = jnp.einsum('btc,cn->btn', x.astype(bf16), p['proj_w'],
                        preferred_element_type=f32) + p['proj_b']
    vals, idxs = jax.lax.top_k(logits, TOPK)
    probs = jax.nn.softmax(vals, axis=-1)
    freqs = MIN_FREQUENCY * jnp.exp(idxs.astype(f32) *
                                    (LOG2 / CLASSES_PER_OCTAVE))
    freqs = jnp.where(freqs <= MIN_FREQUENCY, 0.0, freqs)
    f0 = (probs * freqs).sum(-1, keepdims=True)
    f0 = jnp.where(f0 <= MIN_FREQUENCY, 0.0, f0)
    return f0, logits


if __name__ == "__main__":
    B, T = 2, 16
    key = jax.random.PRNGKey(0)
    kx, kg, kp = jax.random.split(key, 3)
    # Channels-last inputs (== the PyTorch (B, C, T) tensors transposed).
    x = jax.random.normal(kx, (B, T, INTER_CHANNELS), jnp.float32)
    g = jax.random.normal(kg, (B, T, GIN_CHANNELS), jnp.float32)
    params = init_params(kp)

    f0_ref, logits_ref = reference_forward(x, g, params)

    # Default tiling (single tile at this T) and a forced multi-tile run that
    # exercises the halo handling at row-tile boundaries.
    f0_a, logits_a = pitch_predictor_forward(x, g, params)
    f0_b, logits_b = pitch_predictor_forward(x, g, params, tile_t=8)
    jax.block_until_ready((f0_a, logits_a, f0_b, logits_b))

    lref = np.asarray(logits_ref)
    fref = np.asarray(f0_ref)
    for f0_k, logits_k in ((f0_a, logits_a), (f0_b, logits_b)):
        assert f0_k.shape == (B, T, 1)
        assert logits_k.shape == (B, T, NUM_CLASSES)
        np.testing.assert_allclose(
            np.asarray(logits_k.astype(jnp.float32)), lref,
            rtol=2e-2, atol=2e-2)
        np.testing.assert_allclose(
            np.asarray(f0_k), fref, rtol=1e-2, atol=1e-1)
    print("KERNEL_OK")
</pallas_src>

<mosaic_0001>
module attributes {stable_mosaic.version = 11 : i64} {
  func.func @kernel(%arg0: i32, %arg1: i32, %arg2: memref<1x1x32x32xf32, #tpu.memory_space<vmem>>, %arg3: memref<1x1x32x32xbf16, #tpu.memory_space<vmem>>, %arg4: memref<32x32xbf16, #tpu.memory_space<vmem>>, %arg5: memref<1x32xf32, #tpu.memory_space<vmem>>, %arg6: memref<2x7x32xf32, #tpu.memory_space<vmem>>, %arg7: memref<2x1x32xf32, #tpu.memory_space<vmem>>, %arg8: memref<2x1x32xf32, #tpu.memory_space<vmem>>, %arg9: memref<2x1x32xf32, #tpu.memory_space<vmem>>, %arg10: memref<2x32x32xbf16, #tpu.memory_space<vmem>>, %arg11: memref<2x1x32xf32, #tpu.memory_space<vmem>>, %arg12: memref<2x32x32xbf16, #tpu.memory_space<vmem>>, %arg13: memref<2x1x32xf32, #tpu.memory_space<vmem>>, %arg14: memref<32x128xbf16, #tpu.memory_space<vmem>>, %arg15: memref<1x128xf32, #tpu.memory_space<vmem>>, %arg16: memref<1x1x16x128xbf16, #tpu.memory_space<vmem>>, %arg17: memref<1x1x16x8xf32, #tpu.memory_space<vmem>>, %arg18: memref<48x32xf32, #tpu.memory_space<vmem>>) attributes {dimension_semantics = [#tpu.dimension_semantics<parallel>, #tpu.dimension_semantics<parallel>], iteration_bounds = array<i64: 2, 1>, scalar_prefetch = 0 : i64, scratch_operands = 1 : i64, tpu.core_type = #tpu.core_type<tc>, window_params = [{transform_indices = @transform_0, window_bounds = array<i64: 1, 1, 32, 32>}, {transform_indices = @transform_1, window_bounds = array<i64: 1, 1, 32, 32>}, {pipeline_mode = #tpu.pipeline_mode<synchronous>, transform_indices = @transform_2, window_bounds = array<i64: 32, 32>}, {pipeline_mode = #tpu.pipeline_mode<synchronous>, transform_indices = @transform_3, window_bounds = array<i64: 1, 32>}, {pipeline_mode = #tpu.pipeline_mode<synchronous>, transform_indices = @transform_4, window_bounds = array<i64: 2, 7, 32>}, {pipeline_mode = #tpu.pipeline_mode<synchronous>, transform_indices = @transform_5, window_bounds = array<i64: 2, 1, 32>}, {pipeline_mode = #tpu.pipeline_mode<synchronous>, transform_indices = @transform_6, window_bounds = array<i64: 2, 1, 32>}, {pipeline_mode = #tpu.pipeline_mode<synchronous>, transform_indices = @transform_7, window_bounds = array<i64: 2, 1, 32>}, {pipeline_mode = #tpu.pipeline_mode<synchronous>, transform_indices = @transform_8, window_bounds = array<i64: 2, 32, 32>}, {pipeline_mode = #tpu.pipeline_mode<synchronous>, transform_indices = @transform_9, window_bounds = array<i64: 2, 1, 32>}, {pipeline_mode = #tpu.pipeline_mode<synchronous>, transform_indices = @transform_10, window_bounds = array<i64: 2, 32, 32>}, {pipeline_mode = #tpu.pipeline_mode<synchronous>, transform_indices = @transform_11, window_bounds = array<i64: 2, 1, 32>}, {pipeline_mode = #tpu.pipeline_mode<synchronous>, transform_indices = @transform_12, window_bounds = array<i64: 32, 128>}, {pipeline_mode = #tpu.pipeline_mode<synchronous>, transform_indices = @transform_13, window_bounds = array<i64: 1, 128>}, {transform_indices = @transform_14, window_bounds = array<i64: 1, 1, 16, 128>}, {transform_indices = @transform_15, window_bounds = array<i64: 1, 1, 16, 8>}]} {
    %0 = tpu.iota {dimensions = array<i32: 0>} : vector<32x1xi32>
    %c16_i32 = arith.constant 16 : i32
    %1 = arith.muli %arg1, %c16_i32 : i32
    %c8_i32 = arith.constant 8 : i32
    %2 = arith.subi %1, %c8_i32 : i32
    %3 = vector.broadcast %2 : i32 to vector<32x1xi32>
    %4 = arith.addi %0, %3 : vector<32x1xi32>
    %c0_i32 = arith.constant 0 : i32
    %5 = vector.broadcast %c0_i32 : i32 to vector<32x1xi32>
    %6 = arith.cmpi sge, %4, %5 : vector<32x1xi32>
    %c16_i32_0 = arith.constant 16 : i32
    %7 = vector.broadcast %c16_i32_0 : i32 to vector<32x1xi32>
    %8 = arith.cmpi slt, %4, %7 : vector<32x1xi32>
    %9 = arith.andi %6, %8 : vector<32x1xi1>
    %cst = arith.constant 0.000000e+00 : f32
    %10 = vector.broadcast %cst : f32 to vector<8x32xf32>
    %c0 = arith.constant 0 : index
    %c0_1 = arith.constant 0 : index
    %11 = vector.load %arg18[%c0, %c0_1] : memref<48x32xf32, #tpu.memory_space<vmem>>, vector<8x32xf32>
    tpu.vector_store %arg18[%c0, %c0_1], %10 {strides = array<i32>} : memref<48x32xf32, #tpu.memory_space<vmem>>, vector<8x32xf32>,
    %cst_2 = arith.constant 0.000000e+00 : f32
    %12 = vector.broadcast %cst_2 : f32 to vector<8x32xf32>
    %c40 = arith.constant 40 : index
    %c0_3 = arith.constant 0 : index
    %13 = vector.load %arg18[%c40, %c0_3] : memref<48x32xf32, #tpu.memory_space<vmem>>, vector<8x32xf32>
    tpu.vector_store %arg18[%c40, %c0_3], %12 {strides = array<i32>} : memref<48x32xf32, #tpu.memory_space<vmem>>, vector<8x32xf32>,
    %c0_4 = arith.constant 0 : index
    %c0_5 = arith.constant 0 : index
    %c0_6 = arith.constant 0 : index
    %c0_7 = arith.constant 0 : index
    %14 = vector.load %arg2[%c0_4, %c0_5, %c0_6, %c0_7] : memref<1x1x32x32xf32, #tpu.memory_space<vmem>>, vector<1x1x32x32xf32>
    %15 = vector.shape_cast %14 : vector<1x1x32x32xf32> to vector<32x32xf32>
    %c0_8 = arith.constant 0 : index
    %c0_9 = arith.constant 0 : index
    %c0_10 = arith.constant 0 : index
    %c0_11 = arith.constant 0 : index
    %16 = vector.load %arg3[%c0_8, %c0_9, %c0_10, %c0_11] : memref<1x1x32x32xbf16, #tpu.memory_space<vmem>>, vector<1x1x32x32xbf16>
    %17 = vector.shape_cast %16 : vector<1x1x32x32xbf16> to vector<32x32xbf16>
    %c0_12 = arith.constant 0 : index
    %c0_13 = arith.constant 0 : index
    %18 = vector.load %arg4[%c0_12, %c0_13] : memref<32x32xbf16, #tpu.memory_space<vmem>>, vector<32x32xbf16>
    %cst_14 = arith.constant dense<0.000000e+00> : vector<32x32xf32>
    %19 = tpu.matmul %17, %18, %cst_14 {dimension_numbers = #tpu.dot_dimension_numbers<[1], [0], [0], [1], [0, 0, 1, 1], [], []>} : vector<32x32xbf16>, vector<32x32xbf16>, vector<32x32xf32> -> vector<32x32xf32>
    %20 = arith.addf %15, %19 : vector<32x32xf32>
    %c0_15 = arith.constant 0 : index
    %c0_16 = arith.constant 0 : index
    %21 = vector.load %arg5[%c0_15, %c0_16] : memref<1x32xf32, #tpu.memory_space<vmem>>, vector<1x32xf32>
    %22 = vector.broadcast %21 : vector<1x32xf32> to vector<32x32xf32>
    %23 = arith.addf %20, %22 : vector<32x32xf32>
    %cst_17 = arith.constant 0.000000e+00 : f32
    %24 = vector.shape_cast %9 : vector<32x1xi1> to vector<32x1xi1>
    %25 = vector.broadcast %24 : vector<32x1xi1> to vector<32x32xi1>
    %26 = vector.broadcast %cst_17 : f32 to vector<32x32xf32>
    %27 = arith.select %25, %23, %26 : vector<32x32xi1>, vector<32x32xf32>
    %c8 = arith.constant 8 : index
    %c0_18 = arith.constant 0 : index
    %28 = vector.load %arg18[%c8, %c0_18] : memref<48x32xf32, #tpu.memory_space<vmem>>, vector<32x32xf32>
    tpu.vector_store %arg18[%c8, %c0_18], %27 {strides = array<i32>} : memref<48x32xf32, #tpu.memory_space<vmem>>, vector<32x32xf32>,
    %c0_19 = arith.constant 0 : index
    %c0_20 = arith.constant 0 : index
    %c0_21 = arith.constant 0 : index
    %29 = vector.load %arg6[%c0_19, %c0_20, %c0_21] : memref<2x7x32xf32, #tpu.memory_space<vmem>>, vector<1x7x32xf32>
    %30 = vector.shape_cast %29 : vector<1x7x32xf32> to vector<7x32xf32>
    %31 = vector.extract_strided_slice %30 {offsets = [3, 0], sizes = [1, 32], strides = [1, 1]} : vector<7x32xf32> to vector<1x32xf32>
    %32 = vector.broadcast %31 : vector<1x32xf32> to vector<32x32xf32>
    %33 = arith.mulf %27, %32 : vector<32x32xf32>
    %c0_22 = arith.constant 0 : index
    %c0_23 = arith.constant 0 : index
    %c0_24 = arith.constant 0 : index
    %34 = vector.load %arg7[%c0_22, %c0_23, %c0_24] : memref<2x1x32xf32, #tpu.memory_space<vmem>>, vector<1x1x32xf32>
    %35 = vector.shape_cast %34 : vector<1x1x32xf32> to vector<1x32xf32>
    %36 = vector.broadcast %35 : vector<1x32xf32> to vector<32x32xf32>
    %37 = arith.addf %33, %36 : vector<32x32xf32>
    %c5 = arith.constant 5 : index
    %c0_25 = arith.constant 0 : index
    %38 = vector.load %arg18[%c5, %c0_25] : memref<48x32xf32, #tpu.memory_space<vmem>>, vector<32x32xf32>
    %39 = vector.extract_strided_slice %30 {offsets = [0, 0], sizes = [1, 32], strides = [1, 1]} : vector<7x32xf32> to vector<1x32xf32>
    %40 = vector.broadcast %39 : vector<1x32xf32> to vector<32x32xf32>
    %41 = arith.mulf %38, %40 : vector<32x32xf32>
    %42 = arith.addf %37, %41 : vector<32x32xf32>
    %c6 = arith.constant 6 : index
    %c0_26 = arith.constant 0 : index
    %43 = vector.load %arg18[%c6, %c0_26] : memref<48x32xf32, #tpu.memory_space<vmem>>, vector<32x32xf32>
    %44 = vector.extract_strided_slice %30 {offsets = [1, 0], sizes = [1, 32], strides = [1, 1]} : vector<7x32xf32> to vector<1x32xf32>
    %45 = vector.broadcast %44 : vector<1x32xf32> to vector<32x32xf32>
    %46 = arith.mulf %43, %45 : vector<32x32xf32>
    %47 = arith.addf %42, %46 : vector<32x32xf32>
    %c7 = arith.constant 7 : index
    %c0_27 = arith.constant 0 : index
    %48 = vector.load %arg18[%c7, %c0_27] : memref<48x32xf32, #tpu.memory_space<vmem>>, vector<32x32xf32>
    %49 = vector.extract_strided_slice %30 {offsets = [2, 0], sizes = [1, 32], strides = [1, 1]} : vector<7x32xf32> to vector<1x32xf32>
    %50 = vector.broadcast %49 : vector<1x32xf32> to vector<32x32xf32>
    %51 = arith.mulf %48, %50 : vector<32x32xf32>
    %52 = arith.addf %47, %51 : vector<32x32xf32>
    %c9 = arith.constant 9 : index
    %c0_28 = arith.constant 0 : index
    %53 = vector.load %arg18[%c9, %c0_28] : memref<48x32xf32, #tpu.memory_space<vmem>>, vector<32x32xf32>
    %54 = vector.extract_strided_slice %30 {offsets = [4, 0], sizes = [1, 32], strides = [1, 1]} : vector<7x32xf32> to vector<1x32xf32>
    %55 = vector.broadcast %54 : vector<1x32xf32> to vector<32x32xf32>
    %56 = arith.mulf %53, %55 : vector<32x32xf32>
    %57 = arith.addf %52, %56 : vector<32x32xf32>
    %c10 = arith.constant 10 : index
    %c0_29 = arith.constant 0 : index
    %58 = vector.load %arg18[%c10, %c0_29] : memref<48x32xf32, #tpu.memory_space<vmem>>, vector<32x32xf32>
    %59 = vector.extract_strided_slice %30 {offsets = [5, 0], sizes = [1, 32], strides = [1, 1]} : vector<7x32xf32> to vector<1x32xf32>
    %60 = vector.broadcast %59 : vector<1x32xf32> to vector<32x32xf32>
    %61 = arith.mulf %58, %60 : vector<32x32xf32>
    %62 = arith.addf %57, %61 : vector<32x32xf32>
    %c11 = arith.constant 11 : index
    %c0_30 = arith.constant 0 : index
    %63 = vector.load %arg18[%c11, %c0_30] : memref<48x32xf32, #tpu.memory_space<vmem>>, vector<32x32xf32>
    %64 = vector.extract_strided_slice %30 {offsets = [6, 0], sizes = [1, 32], strides = [1, 1]} : vector<7x32xf32> to vector<1x32xf32>
    %65 = vector.broadcast %64 : vector<1x32xf32> to vector<32x32xf32>
    %66 = arith.mulf %63, %65 : vector<32x32xf32>
    %67 = arith.addf %62, %66 : vector<32x32xf32>
    %cst_31 = arith.constant dense<0.000000e+00> : vector<32xf32>
    %68 = vector.multi_reduction <add>, %67, %cst_31 [1] : vector<32x32xf32> to vector<32xf32>
    %69 = vector.shape_cast %68 : vector<32xf32> to vector<32x1xf32>
    %cst_32 = arith.constant 3.200000e+01 : f32
    %70 = vector.broadcast %cst_32 : f32 to vector<32x1xf32>
    %71 = arith.divf %69, %70 : vector<32x1xf32>
    %72 = vector.broadcast %71 : vector<32x1xf32> to vector<32x32xf32>
    %73 = arith.subf %67, %72 : vector<32x32xf32>
    %74 = arith.mulf %73, %73 : vector<32x32xf32>
    %cst_33 = arith.constant dense<0.000000e+00> : vector<32xf32>
    %75 = vector.multi_reduction <add>, %74, %cst_33 [1] : vector<32x32xf32> to vector<32xf32>
    %76 = vector.shape_cast %75 : vector<32xf32> to vector<32x1xf32>
    %cst_34 = arith.constant 3.200000e+01 : f32
    %77 = vector.broadcast %cst_34 : f32 to vector<32x1xf32>
    %78 = arith.divf %76, %77 : vector<32x1xf32>
    %79 = vector.broadcast %71 : vector<32x1xf32> to vector<32x32xf32>
    %80 = arith.subf %67, %79 : vector<32x32xf32>
    %cst_35 = arith.constant 9.99999974E-6 : f32
    %81 = vector.broadcast %cst_35 : f32 to vector<32x1xf32>
    %82 = arith.addf %78, %81 : vector<32x1xf32>
    %83 = math.rsqrt %82 : vector<32x1xf32>
    %84 = vector.broadcast %83 : vector<32x1xf32> to vector<32x32xf32>
    %85 = arith.mulf %80, %84 : vector<32x32xf32>
    %c0_36 = arith.constant 0 : index
    %c0_37 = arith.constant 0 : index
    %c0_38 = arith.constant 0 : index
    %86 = vector.load %arg8[%c0_36, %c0_37, %c0_38] : memref<2x1x32xf32, #tpu.memory_space<vmem>>, vector<1x1x32xf32>
    %87 = vector.shape_cast %86 : vector<1x1x32xf32> to vector<1x32xf32>
    %88 = vector.broadcast %87 : vector<1x32xf32> to vector<32x32xf32>
    %89 = arith.mulf %85, %88 : vector<32x32xf32>
    %c0_39 = arith.constant 0 : index
    %c0_40 = arith.constant 0 : index
    %c0_41 = arith.constant 0 : index
    %90 = vector.load %arg9[%c0_39, %c0_40, %c0_41] : memref<2x1x32xf32, #tpu.memory_space<vmem>>, vector<1x1x32xf32>
    %91 = vector.shape_cast %90 : vector<1x1x32xf32> to vector<1x32xf32>
    %92 = vector.broadcast %91 : vector<1x32xf32> to vector<32x32xf32>
    %93 = arith.addf %89, %92 : vector<32x32xf32>
    %94 = arith.truncf %93 : vector<32x32xf32> to vector<32x32xbf16>
    %c0_42 = arith.constant 0 : index
    %c0_43 = arith.constant 0 : index
    %c0_44 = arith.constant 0 : index
    %95 = vector.load %arg10[%c0_42, %c0_43, %c0_44] : memref<2x32x32xbf16, #tpu.memory_space<vmem>>, vector<1x32x32xbf16>
    %96 = vector.shape_cast %95 : vector<1x32x32xbf16> to vector<32x32xbf16>
    %cst_45 = arith.constant dense<0.000000e+00> : vector<32x32xf32>
    %97 = tpu.matmul %94, %96, %cst_45 {dimension_numbers = #tpu.dot_dimension_numbers<[1], [0], [0], [1], [0, 0, 1, 1], [], []>} : vector<32x32xbf16>, vector<32x32xbf16>, vector<32x32xf32> -> vector<32x32xf32>
    %c0_46 = arith.constant 0 : index
    %c0_47 = arith.constant 0 : index
    %c0_48 = arith.constant 0 : index
    %98 = vector.load %arg11[%c0_46, %c0_47, %c0_48] : memref<2x1x32xf32, #tpu.memory_space<vmem>>, vector<1x1x32xf32>
    %99 = vector.shape_cast %98 : vector<1x1x32xf32> to vector<1x32xf32>
    %100 = vector.broadcast %99 : vector<1x32xf32> to vector<32x32xf32>
    %101 = arith.addf %97, %100 : vector<32x32xf32>
    %cst_49 = arith.constant 1.000000e-01 : f32
    %102 = vector.broadcast %cst_49 : f32 to vector<32x32xf32>
    %103 = arith.mulf %102, %101 : vector<32x32xf32>
    %104 = arith.maximumf %101, %103 : vector<32x32xf32>
    %105 = arith.truncf %104 : vector<32x32xf32> to vector<32x32xbf16>
    %c0_50 = arith.constant 0 : index
    %c0_51 = arith.constant 0 : index
    %c0_52 = arith.constant 0 : index
    %106 = vector.load %arg12[%c0_50, %c0_51, %c0_52] : memref<2x32x32xbf16, #tpu.memory_space<vmem>>, vector<1x32x32xbf16>
    %107 = vector.shape_cast %106 : vector<1x32x32xbf16> to vector<32x32xbf16>
    %cst_53 = arith.constant dense<0.000000e+00> : vector<32x32xf32>
    %108 = tpu.matmul %105, %107, %cst_53 {dimension_numbers = #tpu.dot_dimension_numbers<[1], [0], [0], [1], [0, 0, 1, 1], [], []>} : vector<32x32xbf16>, vector<32x32xbf16>, vector<32x32xf32> -> vector<32x32xf32>
    %c0_54 = arith.constant 0 : index
    %c0_55 = arith.constant 0 : index
    %c0_56 = arith.constant 0 : index
    %109 = vector.load %arg13[%c0_54, %c0_55, %c0_56] : memref<2x1x32xf32, #tpu.memory_space<vmem>>, vector<1x1x32xf32>
    %110 = vector.shape_cast %109 : vector<1x1x32xf32> to vector<1x32xf32>
    %111 = vector.broadcast %110 : vector<1x32xf32> to vector<32x32xf32>
    %112 = arith.addf %108, %111 : vector<32x32xf32>
    %113 = arith.addf %112, %27 : vector<32x32xf32>
    %cst_57 = arith.constant 0.000000e+00 : f32
    %114 = vector.shape_cast %9 : vector<32x1xi1> to vector<32x1xi1>
    %115 = vector.broadcast %114 : vector<32x1xi1> to vector<32x32xi1>
    %116 = vector.broadcast %cst_57 : f32 to vector<32x32xf32>
    %117 = arith.select %115, %113, %116 : vector<32x32xi1>, vector<32x32xf32>
    %c8_58 = arith.constant 8 : index
    %c0_59 = arith.constant 0 : index
    %118 = vector.load %arg18[%c8_58, %c0_59] : memref<48x32xf32, #tpu.memory_space<vmem>>, vector<32x32xf32>
    tpu.vector_store %arg18[%c8_58, %c0_59], %117 {strides = array<i32>} : memref<48x32xf32, #tpu.memory_space<vmem>>, vector<32x32xf32>,
    %c1 = arith.constant 1 : index
    %c0_60 = arith.constant 0 : index
    %c0_61 = arith.constant 0 : index
    %119 = vector.load %arg6[%c1, %c0_60, %c0_61] : memref<2x7x32xf32, #tpu.memory_space<vmem>>, vector<1x7x32xf32>
    %120 = vector.shape_cast %119 : vector<1x7x32xf32> to vector<7x32xf32>
    %121 = vector.extract_strided_slice %120 {offsets = [3, 0], sizes = [1, 32], strides = [1, 1]} : vector<7x32xf32> to vector<1x32xf32>
    %122 = vector.broadcast %121 : vector<1x32xf32> to vector<32x32xf32>
    %123 = arith.mulf %117, %122 : vector<32x32xf32>
    %c1_62 = arith.constant 1 : index
    %c0_63 = arith.constant 0 : index
    %c0_64 = arith.constant 0 : index
    %124 = vector.load %arg7[%c1_62, %c0_63, %c0_64] : memref<2x1x32xf32, #tpu.memory_space<vmem>>, vector<1x1x32xf32>
    %125 = vector.shape_cast %124 : vector<1x1x32xf32> to vector<1x32xf32>
    %126 = vector.broadcast %125 : vector<1x32xf32> to vector<32x32xf32>
    %127 = arith.addf %123, %126 : vector<32x32xf32>
    %c5_65 = arith.constant 5 : index
    %c0_66 = arith.constant 0 : index
    %128 = vector.load %arg18[%c5_65, %c0_66] : memref<48x32xf32, #tpu.memory_space<vmem>>, vector<32x32xf32>
    %129 = vector.extract_strided_slice %120 {offsets = [0, 0], sizes = [1, 32], strides = [1, 1]} : vector<7x32xf32> to vector<1x32xf32>
    %130 = vector.broadcast %129 : vector<1x32xf32> to vector<32x32xf32>
    %131 = arith.mulf %128, %130 : vector<32x32xf32>
    %132 = arith.addf %127, %131 : vector<32x32xf32>
    %c6_67 = arith.constant 6 : index
    %c0_68 = arith.constant 0 : index
    %133 = vector.load %arg18[%c6_67, %c0_68] : memref<48x32xf32, #tpu.memory_space<vmem>>, vector<32x32xf32>
    %134 = vector.extract_strided_slice %120 {offsets = [1, 0], sizes = [1, 32], strides = [1, 1]} : vector<7x32xf32> to vector<1x32xf32>
    %135 = vector.broadcast %134 : vector<1x32xf32> to vector<32x32xf32>
    %136 = arith.mulf %133, %135 : vector<32x32xf32>
    %137 = arith.addf %132, %136 : vector<32x32xf32>
    %c7_69 = arith.constant 7 : index
    %c0_70 = arith.constant 0 : index
    %138 = vector.load %arg18[%c7_69, %c0_70] : memref<48x32xf32, #tpu.memory_space<vmem>>, vector<32x32xf32>
    %139 = vector.extract_strided_slice %120 {offsets = [2, 0], sizes = [1, 32], strides = [1, 1]} : vector<7x32xf32> to vector<1x32xf32>
    %140 = vector.broadcast %139 : vector<1x32xf32> to vector<32x32xf32>
    %141 = arith.mulf %138, %140 : vector<32x32xf32>
    %142 = arith.addf %137, %141 : vector<32x32xf32>
    %c9_71 = arith.constant 9 : index
    %c0_72 = arith.constant 0 : index
    %143 = vector.load %arg18[%c9_71, %c0_72] : memref<48x32xf32, #tpu.memory_space<vmem>>, vector<32x32xf32>
    %144 = vector.extract_strided_slice %120 {offsets = [4, 0], sizes = [1, 32], strides = [1, 1]} : vector<7x32xf32> to vector<1x32xf32>
    %145 = vector.broadcast %144 : vector<1x32xf32> to vector<32x32xf32>
    %146 = arith.mulf %143, %145 : vector<32x32xf32>
    %147 = arith.addf %142, %146 : vector<32x32xf32>
    %c10_73 = arith.constant 10 : index
    %c0_74 = arith.constant 0 : index
    %148 = vector.load %arg18[%c10_73, %c0_74] : memref<48x32xf32, #tpu.memory_space<vmem>>, vector<32x32xf32>
    %149 = vector.extract_strided_slice %120 {offsets = [5, 0], sizes = [1, 32], strides = [1, 1]} : vector<7x32xf32> to vector<1x32xf32>
    %150 = vector.broadcast %149 : vector<1x32xf32> to vector<32x32xf32>
    %151 = arith.mulf %148, %150 : vector<32x32xf32>
    %152 = arith.addf %147, %151 : vector<32x32xf32>
    %c11_75 = arith.constant 11 : index
    %c0_76 = arith.constant 0 : index
    %153 = vector.load %arg18[%c11_75, %c0_76] : memref<48x32xf32, #tpu.memory_space<vmem>>, vector<32x32xf32>
    %154 = vector.extract_strided_slice %120 {offsets = [6, 0], sizes = [1, 32], strides = [1, 1]} : vector<7x32xf32> to vector<1x32xf32>
    %155 = vector.broadcast %154 : vector<1x32xf32> to vector<32x32xf32>
    %156 = arith.mulf %153, %155 : vector<32x32xf32>
    %157 = arith.addf %152, %156 : vector<32x32xf32>
    %cst_77 = arith.constant dense<0.000000e+00> : vector<32xf32>
    %158 = vector.multi_reduction <add>, %157, %cst_77 [1] : vector<32x32xf32> to vector<32xf32>
    %159 = vector.shape_cast %158 : vector<32xf32> to vector<32x1xf32>
    %cst_78 = arith.constant 3.200000e+01 : f32
    %160 = vector.broadcast %cst_78 : f32 to vector<32x1xf32>
    %161 = arith.divf %159, %160 : vector<32x1xf32>
    %162 = vector.broadcast %161 : vector<32x1xf32> to vector<32x32xf32>
    %163 = arith.subf %157, %162 : vector<32x32xf32>
    %164 = arith.mulf %163, %163 : vector<32x32xf32>
    %cst_79 = arith.constant dense<0.000000e+00> : vector<32xf32>
    %165 = vector.multi_reduction <add>, %164, %cst_79 [1] : vector<32x32xf32> to vector<32xf32>
    %166 = vector.shape_cast %165 : vector<32xf32> to vector<32x1xf32>
    %cst_80 = arith.constant 3.200000e+01 : f32
    %167 = vector.broadcast %cst_80 : f32 to vector<32x1xf32>
    %168 = arith.divf %166, %167 : vector<32x1xf32>
    %169 = vector.broadcast %161 : vector<32x1xf32> to vector<32x32xf32>
    %170 = arith.subf %157, %169 : vector<32x32xf32>
    %cst_81 = arith.constant 9.99999974E-6 : f32
    %171 = vector.broadcast %cst_81 : f32 to vector<32x1xf32>
    %172 = arith.addf %168, %171 : vector<32x1xf32>
    %173 = math.rsqrt %172 : vector<32x1xf32>
    %174 = vector.broadcast %173 : vector<32x1xf32> to vector<32x32xf32>
    %175 = arith.mulf %170, %174 : vector<32x32xf32>
    %c1_82 = arith.constant 1 : index
    %c0_83 = arith.constant 0 : index
    %c0_84 = arith.constant 0 : index
    %176 = vector.load %arg8[%c1_82, %c0_83, %c0_84] : memref<2x1x32xf32, #tpu.memory_space<vmem>>, vector<1x1x32xf32>
    %177 = vector.shape_cast %176 : vector<1x1x32xf32> to vector<1x32xf32>
    %178 = vector.broadcast %177 : vector<1x32xf32> to vector<32x32xf32>
    %179 = arith.mulf %175, %178 : vector<32x32xf32>
    %c1_85 = arith.constant 1 : index
    %c0_86 = arith.constant 0 : index
    %c0_87 = arith.constant 0 : index
    %180 = vector.load %arg9[%c1_85, %c0_86, %c0_87] : memref<2x1x32xf32, #tpu.memory_space<vmem>>, vector<1x1x32xf32>
    %181 = vector.shape_cast %180 : vector<1x1x32xf32> to vector<1x32xf32>
    %182 = vector.broadcast %181 : vector<1x32xf32> to vector<32x32xf32>
    %183 = arith.addf %179, %182 : vector<32x32xf32>
    %184 = arith.truncf %183 : vector<32x32xf32> to vector<32x32xbf16>
    %c1_88 = arith.constant 1 : index
    %c0_89 = arith.constant 0 : index
    %c0_90 = arith.constant 0 : index
    %185 = vector.load %arg10[%c1_88, %c0_89, %c0_90] : memref<2x32x32xbf16, #tpu.memory_space<vmem>>, vector<1x32x32xbf16>
    %186 = vector.shape_cast %185 : vector<1x32x32xbf16> to vector<32x32xbf16>
    %cst_91 = arith.constant dense<0.000000e+00> : vector<32x32xf32>
    %187 = tpu.matmul %184, %186, %cst_91 {dimension_numbers = #tpu.dot_dimension_numbers<[1], [0], [0], [1], [0, 0, 1, 1], [], []>} : vector<32x32xbf16>, vector<32x32xbf16>, vector<32x32xf32> -> vector<32x32xf32>
    %c1_92 = arith.constant 1 : index
    %c0_93 = arith.constant 0 : index
    %c0_94 = arith.constant 0 : index
    %188 = vector.load %arg11[%c1_92, %c0_93, %c0_94] : memref<2x1x32xf32, #tpu.memory_space<vmem>>, vector<1x1x32xf32>
    %189 = vector.shape_cast %188 : vector<1x1x32xf32> to vector<1x32xf32>
    %190 = vector.broadcast %189 : vector<1x32xf32> to vector<32x32xf32>
    %191 = arith.addf %187, %190 : vector<32x32xf32>
    %cst_95 = arith.constant 1.000000e-01 : f32
    %192 = vector.broadcast %cst_95 : f32 to vector<32x32xf32>
    %193 = arith.mulf %192, %191 : vector<32x32xf32>
    %194 = arith.maximumf %191, %193 : vector<32x32xf32>
    %195 = arith.truncf %194 : vector<32x32xf32> to vector<32x32xbf16>
    %c1_96 = arith.constant 1 : index
    %c0_97 = arith.constant 0 : index
    %c0_98 = arith.constant 0 : index
    %196 = vector.load %arg12[%c1_96, %c0_97, %c0_98] : memref<2x32x32xbf16, #tpu.memory_space<vmem>>, vector<1x32x32xbf16>
    %197 = vector.shape_cast %196 : vector<1x32x32xbf16> to vector<32x32xbf16>
    %cst_99 = arith.constant dense<0.000000e+00> : vector<32x32xf32>
    %198 = tpu.matmul %195, %197, %cst_99 {dimension_numbers = #tpu.dot_dimension_numbers<[1], [0], [0], [1], [0, 0, 1, 1], [], []>} : vector<32x32xbf16>, vector<32x32xbf16>, vector<32x32xf32> -> vector<32x32xf32>
    %c1_100 = arith.constant 1 : index
    %c0_101 = arith.constant 0 : index
    %c0_102 = arith.constant 0 : index
    %199 = vector.load %arg13[%c1_100, %c0_101, %c0_102] : memref<2x1x32xf32, #tpu.memory_space<vmem>>, vector<1x1x32xf32>
    %200 = vector.shape_cast %199 : vector<1x1x32xf32> to vector<1x32xf32>
    %201 = vector.broadcast %200 : vector<1x32xf32> to vector<32x32xf32>
    %202 = arith.addf %198, %201 : vector<32x32xf32>
    %203 = arith.addf %202, %117 : vector<32x32xf32>
    %204 = vector.extract_strided_slice %203 {offsets = [8, 0], sizes = [16, 32], strides = [1, 1]} : vector<32x32xf32> to vector<16x32xf32>
    %205 = arith.truncf %204 : vector<16x32xf32> to vector<16x32xbf16>
    %c0_103 = arith.constant 0 : index
    %c0_104 = arith.constant 0 : index
    %206 = vector.load %arg14[%c0_103, %c0_104] : memref<32x128xbf16, #tpu.memory_space<vmem>>, vector<32x128xbf16>
    %cst_105 = arith.constant dense<0.000000e+00> : vector<16x128xf32>
    %207 = tpu.matmul %205, %206, %cst_105 {dimension_numbers = #tpu.dot_dimension_numbers<[1], [0], [0], [1], [0, 0, 1, 1], [], []>} : vector<16x32xbf16>, vector<32x128xbf16>, vector<16x128xf32> -> vector<16x128xf32>
    %c0_106 = arith.constant 0 : index
    %c0_107 = arith.constant 0 : index
    %208 = vector.load %arg15[%c0_106, %c0_107] : memref<1x128xf32, #tpu.memory_space<vmem>>, vector<1x128xf32>
    %209 = vector.broadcast %208 : vector<1x128xf32> to vector<16x128xf32>
    %210 = arith.addf %207, %209 : vector<16x128xf32>
    %211 = arith.truncf %210 : vector<16x128xf32> to vector<16x128xbf16>
    %c0_108 = arith.constant 0 : index
    %c0_109 = arith.constant 0 : index
    %c0_110 = arith.constant 0 : index
    %c0_111 = arith.constant 0 : index
    %212 = vector.load %arg16[%c0_108, %c0_109, %c0_110, %c0_111] : memref<1x1x16x128xbf16, #tpu.memory_space<vmem>>, vector<1x1x16x128xbf16>
    %213 = vector.shape_cast %212 : vector<1x1x16x128xbf16> to vector<16x128xbf16>
    %214 = vector.shape_cast %211 : vector<16x128xbf16> to vector<1x1x16x128xbf16>
    tpu.vector_store %arg16[%c0_108, %c0_109, %c0_110, %c0_111], %214 {strides = array<i32>} : memref<1x1x16x128xbf16, #tpu.memory_space<vmem>>, vector<1x1x16x128xbf16>,
    %215 = tpu.iota {dimensions = array<i32: 1>} : vector<16x128xi32>
    %cst_112 = arith.constant dense<0xFF800000> : vector<16xf32>
    %216 = vector.multi_reduction <maximumf>, %210, %cst_112 [1] : vector<16x128xf32> to vector<16xf32>
    %217 = vector.shape_cast %216 : vector<16xf32> to vector<16x1xf32>
    %218 = vector.broadcast %217 : vector<16x1xf32> to vector<16x128xf32>
    %219 = arith.cmpf oeq, %210, %218 : vector<16x128xf32>
    %c128_i32 = arith.constant 128 : i32
    %220 = vector.broadcast %c128_i32 : i32 to vector<16x128xi32>
    %221 = arith.select %219, %215, %220 : vector<16x128xi1>, vector<16x128xi32>
    %cst_113 = arith.constant dense<2147483647> : vector<16xi32>
    %222 = vector.multi_reduction <minsi>, %221, %cst_113 [1] : vector<16x128xi32> to vector<16xi32>
    %223 = vector.shape_cast %222 : vector<16xi32> to vector<16x1xi32>
    %224 = vector.broadcast %223 : vector<16x1xi32> to vector<16x128xi32>
    %225 = arith.cmpi eq, %215, %224 : vector<16x128xi32>
    %cst_114 = arith.constant 0xFF800000 : f32
    %226 = vector.broadcast %cst_114 : f32 to vector<16x128xf32>
    %227 = arith.select %225, %226, %210 : vector<16x128xi1>, vector<16x128xf32>
    %cst_115 = arith.constant dense<0xFF800000> : vector<16xf32>
    %228 = vector.multi_reduction <maximumf>, %227, %cst_115 [1] : vector<16x128xf32> to vector<16xf32>
    %229 = vector.shape_cast %228 : vector<16xf32> to vector<16x1xf32>
    %230 = vector.broadcast %229 : vector<16x1xf32> to vector<16x128xf32>
    %231 = arith.cmpf oeq, %227, %230 : vector<16x128xf32>
    %c128_i32_116 = arith.constant 128 : i32
    %232 = vector.broadcast %c128_i32_116 : i32 to vector<16x128xi32>
    %233 = arith.select %231, %215, %232 : vector<16x128xi1>, vector<16x128xi32>
    %cst_117 = arith.constant dense<2147483647> : vector<16xi32>
    %234 = vector.multi_reduction <minsi>, %233, %cst_117 [1] : vector<16x128xi32> to vector<16xi32>
    %235 = vector.shape_cast %234 : vector<16xi32> to vector<16x1xi32>
    %236 = vector.broadcast %235 : vector<16x1xi32> to vector<16x128xi32>
    %237 = arith.cmpi eq, %215, %236 : vector<16x128xi32>
    %cst_118 = arith.constant 0xFF800000 : f32
    %238 = vector.broadcast %cst_118 : f32 to vector<16x128xf32>
    %239 = arith.select %237, %238, %227 : vector<16x128xi1>, vector<16x128xf32>
    %cst_119 = arith.constant dense<0xFF800000> : vector<16xf32>
    %240 = vector.multi_reduction <maximumf>, %239, %cst_119 [1] : vector<16x128xf32> to vector<16xf32>
    %241 = vector.shape_cast %240 : vector<16xf32> to vector<16x1xf32>
    %242 = vector.broadcast %241 : vector<16x1xf32> to vector<16x128xf32>
    %243 = arith.cmpf oeq, %239, %242 : vector<16x128xf32>
    %c128_i32_120 = arith.constant 128 : i32
    %244 = vector.broadcast %c128_i32_120 : i32 to vector<16x128xi32>
    %245 = arith.select %243, %215, %244 : vector<16x128xi1>, vector<16x128xi32>
    %cst_121 = arith.constant dense<2147483647> : vector<16xi32>
    %246 = vector.multi_reduction <minsi>, %245, %cst_121 [1] : vector<16x128xi32> to vector<16xi32>
    %247 = vector.shape_cast %246 : vector<16xi32> to vector<16x1xi32>
    %248 = vector.broadcast %247 : vector<16x1xi32> to vector<16x128xi32>
    %249 = arith.cmpi eq, %215, %248 : vector<16x128xi32>
    %cst_122 = arith.constant 0xFF800000 : f32
    %250 = vector.broadcast %cst_122 : f32 to vector<16x128xf32>
    %251 = arith.select %249, %250, %239 : vector<16x128xi1>, vector<16x128xf32>
    %cst_123 = arith.constant dense<0xFF800000> : vector<16xf32>
    %252 = vector.multi_reduction <maximumf>, %251, %cst_123 [1] : vector<16x128xf32> to vector<16xf32>
    %253 = vector.shape_cast %252 : vector<16xf32> to vector<16x1xf32>
    %254 = vector.broadcast %253 : vector<16x1xf32> to vector<16x128xf32>
    %255 = arith.cmpf oeq, %251, %254 : vector<16x128xf32>
    %c128_i32_124 = arith.constant 128 : i32
    %256 = vector.broadcast %c128_i32_124 : i32 to vector<16x128xi32>
    %257 = arith.select %255, %215, %256 : vector<16x128xi1>, vector<16x128xi32>
    %cst_125 = arith.constant dense<2147483647> : vector<16xi32>
    %258 = vector.multi_reduction <minsi>, %257, %cst_125 [1] : vector<16x128xi32> to vector<16xi32>
    %259 = vector.shape_cast %258 : vector<16xi32> to vector<16x1xi32>
    %cst_126 = arith.constant 1.000000e+00 : f32
    %260 = vector.broadcast %cst_126 : f32 to vector<16x1xf32>
    %261 = arith.subf %229, %217 : vector<16x1xf32>
    %262 = math.exp %261 : vector<16x1xf32>
    %263 = arith.subf %241, %217 : vector<16x1xf32>
    %264 = math.exp %263 : vector<16x1xf32>
    %265 = arith.subf %253, %217 : vector<16x1xf32>
    %266 = math.exp %265 : vector<16x1xf32>
    %267 = arith.addf %260, %262 : vector<16x1xf32>
    %268 = arith.addf %267, %264 : vector<16x1xf32>
    %269 = arith.addf %268, %266 : vector<16x1xf32>
    %cst_127 = arith.constant 0.000000e+00 : f32
    %270 = vector.broadcast %cst_127 : f32 to vector<16x1xf32>
    %271 = arith.sitofp %223 : vector<16x1xi32> to vector<16x1xf32>
    %cst_128 = arith.constant 0.0144405663 : f32
    %272 = vector.broadcast %cst_128 : f32 to vector<16x1xf32>
    %273 = arith.mulf %271, %272 : vector<16x1xf32>
    %274 = math.exp %273 : vector<16x1xf32>
    %cst_129 = arith.constant 2.000000e+01 : f32
    %275 = vector.broadcast %cst_129 : f32 to vector<16x1xf32>
    %276 = arith.mulf %275, %274 : vector<16x1xf32>
    %cst_130 = arith.constant 2.000000e+01 : f32
    %277 = vector.broadcast %cst_130 : f32 to vector<16x1xf32>
    %278 = arith.cmpf ole, %276, %277 : vector<16x1xf32>
    %cst_131 = arith.constant 0.000000e+00 : f32
    %279 = vector.broadcast %cst_131 : f32 to vector<16x1xf32>
    %280 = arith.select %278, %279, %276 : vector<16x1xi1>, vector<16x1xf32>
    %281 = arith.mulf %260, %280 : vector<16x1xf32>
    %282 = arith.addf %270, %281 : vector<16x1xf32>
    %283 = arith.sitofp %235 : vector<16x1xi32> to vector<16x1xf32>
    %cst_132 = arith.constant 0.0144405663 : f32
    %284 = vector.broadcast %cst_132 : f32 to vector<16x1xf32>
    %285 = arith.mulf %283, %284 : vector<16x1xf32>
    %286 = math.exp %285 : vector<16x1xf32>
    %cst_133 = arith.constant 2.000000e+01 : f32
    %287 = vector.broadcast %cst_133 : f32 to vector<16x1xf32>
    %288 = arith.mulf %287, %286 : vector<16x1xf32>
    %cst_134 = arith.constant 2.000000e+01 : f32
    %289 = vector.broadcast %cst_134 : f32 to vector<16x1xf32>
    %290 = arith.cmpf ole, %288, %289 : vector<16x1xf32>
    %cst_135 = arith.constant 0.000000e+00 : f32
    %291 = vector.broadcast %cst_135 : f32 to vector<16x1xf32>
    %292 = arith.select %290, %291, %288 : vector<16x1xi1>, vector<16x1xf32>
    %293 = arith.mulf %262, %292 : vector<16x1xf32>
    %294 = arith.addf %282, %293 : vector<16x1xf32>
    %295 = arith.sitofp %247 : vector<16x1xi32> to vector<16x1xf32>
    %cst_136 = arith.constant 0.0144405663 : f32
    %296 = vector.broadcast %cst_136 : f32 to vector<16x1xf32>
    %297 = arith.mulf %295, %296 : vector<16x1xf32>
    %298 = math.exp %297 : vector<16x1xf32>
    %cst_137 = arith.constant 2.000000e+01 : f32
    %299 = vector.broadcast %cst_137 : f32 to vector<16x1xf32>
    %300 = arith.mulf %299, %298 : vector<16x1xf32>
    %cst_138 = arith.constant 2.000000e+01 : f32
    %301 = vector.broadcast %cst_138 : f32 to vector<16x1xf32>
    %302 = arith.cmpf ole, %300, %301 : vector<16x1xf32>
    %cst_139 = arith.constant 0.000000e+00 : f32
    %303 = vector.broadcast %cst_139 : f32 to vector<16x1xf32>
    %304 = arith.select %302, %303, %300 : vector<16x1xi1>, vector<16x1xf32>
    %305 = arith.mulf %264, %304 : vector<16x1xf32>
    %306 = arith.addf %294, %305 : vector<16x1xf32>
    %307 = arith.sitofp %259 : vector<16x1xi32> to vector<16x1xf32>
    %cst_140 = arith.constant 0.0144405663 : f32
    %308 = vector.broadcast %cst_140 : f32 to vector<16x1xf32>
    %309 = arith.mulf %307, %308 : vector<16x1xf32>
    %310 = math.exp %309 : vector<16x1xf32>
    %cst_141 = arith.constant 2.000000e+01 : f32
    %311 = vector.broadcast %cst_141 : f32 to vector<16x1xf32>
    %312 = arith.mulf %311, %310 : vector<16x1xf32>
    %cst_142 = arith.constant 2.000000e+01 : f32
    %313 = vector.broadcast %cst_142 : f32 to vector<16x1xf32>
    %314 = arith.cmpf ole, %312, %313 : vector<16x1xf32>
    %cst_143 = arith.constant 0.000000e+00 : f32
    %315 = vector.broadcast %cst_143 : f32 to vector<16x1xf32>
    %316 = arith.select %314, %315, %312 : vector<16x1xi1>, vector<16x1xf32>
    %317 = arith.mulf %266, %316 : vector<16x1xf32>
    %318 = arith.addf %306, %317 : vector<16x1xf32>
    %319 = arith.divf %318, %269 : vector<16x1xf32>
    %cst_144 = arith.constant 2.000000e+01 : f32
    %320 = vector.broadcast %cst_144 : f32 to vector<16x1xf32>
    %321 = arith.cmpf ole, %319, %320 : vector<16x1xf32>
    %cst_145 = arith.constant 0.000000e+00 : f32
    %322 = vector.broadcast %cst_145 : f32 to vector<16x1xf32>
    %323 = arith.select %321, %322, %319 : vector<16x1xi1>, vector<16x1xf32>
    %324 = vector.shape_cast %323 : vector<16x1xf32> to vector<16x1xf32>
    %325 = vector.broadcast %324 : vector<16x1xf32> to vector<16x8xf32>
    %c0_146 = arith.constant 0 : index
    %c0_147 = arith.constant 0 : index
    %c0_148 = arith.constant 0 : index
    %c0_149 = arith.constant 0 : index
    %326 = vector.load %arg17[%c0_146, %c0_147, %c0_148, %c0_149] : memref<1x1x16x8xf32, #tpu.memory_space<vmem>>, vector<1x1x16x8xf32>
    %327 = vector.shape_cast %326 : vector<1x1x16x8xf32> to vector<16x8xf32>
    %328 = vector.shape_cast %325 : vector<16x8xf32> to vector<1x1x16x8xf32>
    tpu.vector_store %arg17[%c0_146, %c0_147, %c0_148, %c0_149], %328 {strides = array<i32>} : memref<1x1x16x8xf32, #tpu.memory_space<vmem>>, vector<1x1x16x8xf32>,
    return
  }
  func.func @transform_0(%arg0: i32, %arg1: i32) -> (i32, i32, i32, i32) {
    %c0_i32 = arith.constant 0 : i32
    %c0_i32_0 = arith.constant 0 : i32
    %c0_i32_1 = arith.constant 0 : i32
    return %arg0, %arg1, %c0_i32, %c0_i32_0 : i32, i32, i32, i32
  }
  func.func @transform_1(%arg0: i32, %arg1: i32) -> (i32, i32, i32, i32) {
    %c0_i32 = arith.constant 0 : i32
    %c0_i32_0 = arith.constant 0 : i32
    %c0_i32_1 = arith.constant 0 : i32
    return %arg0, %arg1, %c0_i32, %c0_i32_0 : i32, i32, i32, i32
  }
  func.func @transform_2(%arg0: i32, %arg1: i32) -> (i32, i32) {
    %c0_i32 = arith.constant 0 : i32
    %c0_i32_0 = arith.constant 0 : i32
    %c0_i32_1 = arith.constant 0 : i32
    return %c0_i32, %c0_i32_0 : i32, i32
  }
  func.func @transform_3(%arg0: i32, %arg1: i32) -> (i32, i32) {
    %c0_i32 = arith.constant 0 : i32
    %c0_i32_0 = arith.constant 0 : i32
    %c0_i32_1 = arith.constant 0 : i32
    return %c0_i32, %c0_i32_0 : i32, i32
  }
  func.func @transform_4(%arg0: i32, %arg1: i32) -> (i32, i32, i32) {
    %c0_i32 = arith.constant 0 : i32
    %c0_i32_0 = arith.constant 0 : i32
    %c0_i32_1 = arith.constant 0 : i32
    %c0_i32_2 = arith.constant 0 : i32
    return %c0_i32, %c0_i32_0, %c0_i32_1 : i32, i32, i32
  }
  func.func @transform_5(%arg0: i32, %arg1: i32) -> (i32, i32, i32) {
    %c0_i32 = arith.constant 0 : i32
    %c0_i32_0 = arith.constant 0 : i32
    %c0_i32_1 = arith.constant 0 : i32
    %c0_i32_2 = arith.constant 0 : i32
    return %c0_i32, %c0_i32_0, %c0_i32_1 : i32, i32, i32
  }
  func.func @transform_6(%arg0: i32, %arg1: i32) -> (i32, i32, i32) {
    %c0_i32 = arith.constant 0 : i32
    %c0_i32_0 = arith.constant 0 : i32
    %c0_i32_1 = arith.constant 0 : i32
    %c0_i32_2 = arith.constant 0 : i32
    return %c0_i32, %c0_i32_0, %c0_i32_1 : i32, i32, i32
  }
  func.func @transform_7(%arg0: i32, %arg1: i32) -> (i32, i32, i32) {
    %c0_i32 = arith.constant 0 : i32
    %c0_i32_0 = arith.constant 0 : i32
    %c0_i32_1 = arith.constant 0 : i32
    %c0_i32_2 = arith.constant 0 : i32
    return %c0_i32, %c0_i32_0, %c0_i32_1 : i32, i32, i32
  }
  func.func @transform_8(%arg0: i32, %arg1: i32) -> (i32, i32, i32) {
    %c0_i32 = arith.constant 0 : i32
    %c0_i32_0 = arith.constant 0 : i32
    %c0_i32_1 = arith.constant 0 : i32
    %c0_i32_2 = arith.constant 0 : i32
    return %c0_i32, %c0_i32_0, %c0_i32_1 : i32, i32, i32
  }
  func.func @transform_9(%arg0: i32, %arg1: i32) -> (i32, i32, i32) {
    %c0_i32 = arith.constant 0 : i32
    %c0_i32_0 = arith.constant 0 : i32
    %c0_i32_1 = arith.constant 0 : i32
    %c0_i32_2 = arith.constant 0 : i32
    return %c0_i32, %c0_i32_0, %c0_i32_1 : i32, i32, i32
  }
  func.func @transform_10(%arg0: i32, %arg1: i32) -> (i32, i32, i32) {
    %c0_i32 = arith.constant 0 : i32
    %c0_i32_0 = arith.constant 0 : i32
    %c0_i32_1 = arith.constant 0 : i32
    %c0_i32_2 = arith.constant 0 : i32
    return %c0_i32, %c0_i32_0, %c0_i32_1 : i32, i32, i32
  }
  func.func @transform_11(%arg0: i32, %arg1: i32) -> (i32, i32, i32) {
    %c0_i32 = arith.constant 0 : i32
    %c0_i32_0 = arith.constant 0 : i32
    %c0_i32_1 = arith.constant 0 : i32
    %c0_i32_2 = arith.constant 0 : i32
    return %c0_i32, %c0_i32_0, %c0_i32_1 : i32, i32, i32
  }
  func.func @transform_12(%arg0: i32, %arg1: i32) -> (i32, i32) {
    %c0_i32 = arith.constant 0 : i32
    %c0_i32_0 = arith.constant 0 : i32
    %c0_i32_1 = arith.constant 0 : i32
    return %c0_i32, %c0_i32_0 : i32, i32
  }
  func.func @transform_13(%arg0: i32, %arg1: i32) -> (i32, i32) {
    %c0_i32 = arith.constant 0 : i32
    %c0_i32_0 = arith.constant 0 : i32
    %c0_i32_1 = arith.constant 0 : i32
    return %c0_i32, %c0_i32_0 : i32, i32
  }
  func.func @transform_14(%arg0: i32, %arg1: i32) -> (i32, i32, i32, i32) {
    %c0_i32 = arith.constant 0 : i32
    %c0_i32_0 = arith.constant 0 : i32
    %c0_i32_1 = arith.constant 0 : i32
    return %arg0, %arg1, %c0_i32, %c0_i32_0 : i32, i32, i32, i32
  }
  func.func @transform_15(%arg0: i32, %arg1: i32) -> (i32, i32, i32, i32) {
    %c0_i32 = arith.constant 0 : i32
    %c0_i32_0 = arith.constant 0 : i32
    %c0_i32_1 = arith.constant 0 : i32
    return %arg0, %arg1, %c0_i32, %c0_i32_0 : i32, i32, i32, i32
  }
}

</mosaic_0001>

<llo_original>
// kernel: tpu_custom_call.1
$region0: #{tpu_custom_call.1}
  #allocation0 [shape = 'u32[]', space=smem, size = 0x4, offset = 0x4, fixed_abs, tag = 'smem constant byte address 0x4 - core index']
  #allocation1 [shape = 'u32[144,128]{1,0:T(1,128)}', space=vmem, size = 0x12000, scoped, tag = 'internal scratch']
  #allocation2 [shape = 'f32[48,32]{1,0:T(8,128)}', space=vmem, size = 0x6000, scoped, tag = 'scratch operand']
  %s0 = inlined_call_operand.hbm [shape: f32[2,1,32,32], index: 0, kind: input, shape index: {}]
  %s1 = inlined_call_operand.vmem [shape: bf16[2,1,32,32], index: 1, kind: input, shape index: {}]
  %s2 = inlined_call_operand.hbm [shape: bf16[32,32], index: 2, kind: input, shape index: {}]
  %s3 = inlined_call_operand.hbm [shape: f32[1,32], index: 3, kind: input, shape index: {}]
  %s4 = inlined_call_operand.vmem [shape: f32[2,7,32], index: 4, kind: input, shape index: {}]
  %s5 = inlined_call_operand.hbm [shape: f32[2,1,32], index: 5, kind: input, shape index: {}]
  %s6 = inlined_call_operand.hbm [shape: f32[2,1,32], index: 6, kind: input, shape index: {}]
  %s7 = inlined_call_operand.hbm [shape: f32[2,1,32], index: 7, kind: input, shape index: {}]
  %s8 = inlined_call_operand.hbm [shape: bf16[2,32,32], index: 8, kind: input, shape index: {}]
  %s9 = inlined_call_operand.hbm [shape: f32[2,1,32], index: 9, kind: input, shape index: {}]
  %s10 = inlined_call_operand.vmem [shape: bf16[2,32,32], index: 10, kind: input, shape index: {}]
  %s11 = inlined_call_operand.vmem [shape: f32[2,1,32], index: 11, kind: input, shape index: {}]
  %s12 = inlined_call_operand.hbm [shape: bf16[32,128], index: 12, kind: input, shape index: {}]
  %s13 = inlined_call_operand.vmem [shape: f32[1,128], index: 13, kind: input, shape index: {}]
  %s14 = inlined_call_operand.hbm [shape: bf16[2,1,16,128], index: 14, kind: output, shape index: {0}]
  %s15 = inlined_call_operand.vmem [shape: f32[2,1,16,8], index: 15, kind: output, shape index: {1}]
  %16 = xla_tuple %s14, %s15
  %s17 = sld [smem:[#allocation0]]
  $region133: #{tpu_custom_call.1} parent=0
    _
  %s19 = ssub.s32 1, %s17
  %s20 = scalar_select 0, %s19, %s17
  $region1: #{tpu_custom_call.1} parent=0
    #allocation3 [shape = 'u8[32768]{0}', space=vmem, size = 0x8000, scoped, tag = 'input window, operand 0']
    #allocation4 [shape = 's32[2]{0}', space=sflag, size = 0x8, scoped, tag = 'scoped memory for tpu_custom_call.1']
    #allocation5 [shape = 's32[2]{0}', space=sflag, size = 0x8, scoped, tag = 'scoped memory for tpu_custom_call.1']
    #allocation6 [shape = 'u8[8192]{0}', space=vmem, size = 0x2000, scoped, tag = 'input window, operand 2, single buffered']
    #allocation7 [shape = 's32[1]{0}', space=sflag, size = 0x4, scoped, tag = 'scoped memory for tpu_custom_call.1']
    #allocation8 [shape = 'u8[512]{0}', space=vmem, size = 0x400, scoped, tag = 'input window, operand 3, single buffered']
    #allocation9 [shape = 'u8[1024]{0}', space=vmem, size = 0x400, scoped, tag = 'input window, operand 5, single buffered']
    #allocation10 [shape = 's32[1]{0}', space=sflag, size = 0x4, scoped, tag = 'scoped memory for tpu_custom_call.1']
    #allocation11 [shape = 'u8[1024]{0}', space=vmem, size = 0x400, scoped, tag = 'input window, operand 6, single buffered']
    #allocation12 [shape = 'u8[1024]{0}', space=vmem, size = 0x400, scoped, tag = 'input window, operand 7, single buffered']
    #allocation13 [shape = 's32[1]{0}', space=sflag, size = 0x4, scoped, tag = 'scoped memory for tpu_custom_call.1']
    #allocation14 [shape = 'u8[16384]{0}', space=vmem, size = 0x4000, scoped, tag = 'input window, operand 8, single buffered']
    #allocation15 [shape = 'u8[1024]{0}', space=vmem, size = 0x400, scoped, tag = 'input window, operand 9, single buffered']
    #allocation16 [shape = 's32[1]{0}', space=sflag, size = 0x4, scoped, tag = 'scoped memory for tpu_custom_call.1']
    #allocation17 [shape = 'u8[8192]{0}', space=vmem, size = 0x2000, scoped, tag = 'input window, operand 12, single buffered']
    #allocation18 [shape = 'u8[8192]{0}', space=vmem, size = 0x2000, scoped, tag = 'output window, operand 0']
    %21 = vsyncpa [#allocation4], 0
    %s22 = scalar_lea.sflag [#allocation4], 1
    %23 = vsyncpa %s22, 0
    %24 = vsyncpa [#allocation7], 0
    %25 = vsyncpa [#allocation10], 0
    %26 = vsyncpa [#allocation13], 0
    %27 = vsyncpa [#allocation16], 0
    %28 = vsyncpa [#allocation5], 0
    %s29 = scalar_lea.sflag [#allocation5], 1
    %30 = vsyncpa %s29, 0
    loop: start=0, step=1, limit=4
    $region2: #{tpu_custom_call.1} parent=1 // loop_pre_header
      _
    $region3: #{tpu_custom_call.1} parent=1 // loop_header
      %s32 = sphi 0, %s36
      %p33 = scmp.ge.s32.totalorder %s32, 4
      %s39 = sphi 0, %s51
      %s40 = sphi 0, %s47
      %s41 = sphi 0, %s39
      %s42 = sphi 0, %s40
      %s43 = sphi 0, %s41
      %s44 = sphi 0, %s42
      %s56 = sphi 0, %s58
      %s59 = sphi 0, %s56
      %s60 = sphi 0, %s59
      %s76 = sphi 0, %s60
      %s84 = sphi 0, %s86
      %s87 = sphi 0, %s84
      %s88 = sphi 0, %s87
      %s104 = sphi 0, %s88
      %s108 = sphi 0, %s108
      %s110 = sphi 0, %s108
      %s111 = sphi 0, %s110
      %s125 = sphi 0, %s111
      %s129 = sphi 0, %s129
      %s131 = sphi 0, %s129
      %s132 = sphi 0, %s131
      %s146 = sphi 0, %s132
      %s150 = sphi 0, %s150
      %s152 = sphi 0, %s150
      %s153 = sphi 0, %s152
      %s167 = sphi 0, %s153
      %s171 = sphi 0, %s171
      %s173 = sphi 0, %s171
      %s174 = sphi 0, %s173
      %s188 = sphi 0, %s174
      %s192 = sphi 0, %s192
      %s194 = sphi 0, %s192
      %s195 = sphi 0, %s194
      %s209 = sphi 0, %s195
      %s213 = sphi 0, %s213
      %s215 = sphi 0, %s213
      %s216 = sphi 0, %s215
      %s230 = sphi 0, %s216
      %s234 = sphi 0, %s234
      %s236 = sphi 0, %s234
      %s237 = sphi 0, %s236
      %s251 = sphi 0, %s237
      %s255 = sphi 0, %s255
      %s257 = sphi 0, %s255
      %s258 = sphi 0, %s257
      %s272 = sphi 0, %s258
      %s276 = sphi 0, %s276
      %s278 = sphi 0, %s276
      %s279 = sphi 0, %s278
      %s293 = sphi 0, %s279
      %s297 = sphi 0, %s297
      %s299 = sphi 0, %s297
      %s300 = sphi 0, %s299
      %s314 = sphi 0, %s300
      %s318 = sphi 0, %s318
      %s320 = sphi 0, %s318
      %s321 = sphi 0, %s320
      %s335 = sphi 0, %s321
      %s339 = sphi 0, %s339
      %s341 = sphi 0, %s339
      %s342 = sphi 0, %s341
      %s356 = sphi 0, %s342
      %s364 = sphi 0, %s366
      %s367 = sphi 0, %s364
      %s368 = sphi 0, %s367
      %s384 = sphi 0, %s368
      %s392 = sphi 0, %s394
      %s395 = sphi 0, %s392
      %s396 = sphi 0, %s395
      %s412 = sphi 0, %s396
    $region4: #{tpu_custom_call.1} parent=1 // loop_header_branch
      %35 = sbr.rel (%p33) target = $region8
    $region5: #{tpu_custom_call.1} parent=1 // loop_body
      %s37 = ssub.s32 %s32, 1
      %s38 = ssub.s32 %s32, 2
      %s45 = sadd.s32 1, %s40
      %p46 = scmp.ge.s32.totalorder %s45, 1
      %s47 = scalar_select %p46, 0, %s45
      %s48 = sadd.s32 1, %s39
      %s49 = scalar_select %p46, %s48, %s39
      %p50 = scmp.ge.s32.totalorder %s49, 2
      %s51 = scalar_select %p50, 0, %s49
      %s52 = ssub.s32 %s39, %s51
      %s53 = ssub.s32 %s40, %s47
      %s54 = sor.u32 %s52, %s53
      %p55 = scmp.eq.s32.totalorder %s54, 0
      %s57 = sadd.s32 %s56, 1
      %s58 = scalar_select %p55, %s56, %s57
      %p61 = pneg %p55
      %p62 = scmp.eq.s32.totalorder %s32, 1
      %p63 = por %p61, %p62
      %p64 = scmp.ne.s32.totalorder %s56, %s59
      %p65 = scmp.eq.s32.totalorder %s32, 0
      %p66 = por %p64, %p65
      %p67 = scmp.ne.s32.totalorder %s56, %s59
      %p68 = scmp.eq.s32.totalorder %s37, 1
      %p69 = por %p67, %p68
      %p70 = scmp.ne.s32.totalorder %s59, %s60
      %p71 = scmp.eq.s32.totalorder %s37, 0
      %p72 = por %p70, %p71
      %p73 = scmp.ne.s32.totalorder %s59, %s60
      %p74 = scmp.eq.s32.totalorder %s38, 1
      %p75 = por %p73, %p74
      %p77 = scmp.ne.s32.totalorder %s60, %s76
      %p78 = scmp.eq.s32.totalorder %s38, 0
      %p79 = por %p77, %p78
      %s80 = ssub.s32 %s39, %s51
      %s81 = ssub.s32 %s40, %s47
      %s82 = sor.u32 %s80, %s81
      %p83 = scmp.eq.s32.totalorder %s82, 0
      %s85 = sadd.s32 %s84, 1
      %s86 = scalar_select %p83, %s84, %s85
      %p89 = pneg %p83
      %p90 = scmp.eq.s32.totalorder %s32, 1
      %p91 = por %p89, %p90
      %p92 = scmp.ne.s32.totalorder %s84, %s87
      %p93 = scmp.eq.s32.totalorder %s32, 0
      %p94 = por %p92, %p93
      %p95 = scmp.ne.s32.totalorder %s84, %s87
      %p96 = scmp.eq.s32.totalorder %s37, 1
      %p97 = por %p95, %p96
      %p98 = scmp.ne.s32.totalorder %s87, %s88
      %p99 = scmp.eq.s32.totalorder %s37, 0
      %p100 = por %p98, %p99
      %p101 = scmp.ne.s32.totalorder %s87, %s88
      %p102 = scmp.eq.s32.totalorder %s38, 1
      %p103 = por %p101, %p102
      %p105 = scmp.ne.s32.totalorder %s88, %s104
      %p106 = scmp.eq.s32.totalorder %s38, 0
      %p107 = por %p105, %p106
      %s109 = sadd.s32 %s108, 1
      %p112 = scmp.eq.s32.totalorder %s32, 1
      %p113 = scmp.ne.s32.totalorder %s108, %s110
      %p114 = scmp.eq.s32.totalorder %s32, 0
      %p115 = por %p113, %p114
      %p116 = scmp.ne.s32.totalorder %s108, %s110
      %p117 = scmp.eq.s32.totalorder %s37, 1
      %p118 = por %p116, %p117
      %p119 = scmp.ne.s32.totalorder %s110, %s111
      %p120 = scmp.eq.s32.totalorder %s37, 0
      %p121 = por %p119, %p120
      %p122 = scmp.ne.s32.totalorder %s110, %s111
      %p123 = scmp.eq.s32.totalorder %s38, 1
      %p124 = por %p122, %p123
      %p126 = scmp.ne.s32.totalorder %s111, %s125
      %p127 = scmp.eq.s32.totalorder %s38, 0
      %p128 = por %p126, %p127
      %s130 = sadd.s32 %s129, 1
      %p133 = scmp.eq.s32.totalorder %s32, 1
      %p134 = scmp.ne.s32.totalorder %s129, %s131
      %p135 = scmp.eq.s32.totalorder %s32, 0
      %p136 = por %p134, %p135
      %p137 = scmp.ne.s32.totalorder %s129, %s131
      %p138 = scmp.eq.s32.totalorder %s37, 1
      %p139 = por %p137, %p138
      %p140 = scmp.ne.s32.totalorder %s131, %s132
      %p141 = scmp.eq.s32.totalorder %s37, 0
      %p142 = por %p140, %p141
      %p143 = scmp.ne.s32.totalorder %s131, %s132
      %p144 = scmp.eq.s32.totalorder %s38, 1
      %p145 = por %p143, %p144
      %p147 = scmp.ne.s32.totalorder %s132, %s146
      %p148 = scmp.eq.s32.totalorder %s38, 0
      %p149 = por %p147, %p148
      %s151 = sadd.s32 %s150, 1
      %p154 = scmp.eq.s32.totalorder %s32, 1
      %p155 = scmp.ne.s32.totalorder %s150, %s152
      %p156 = scmp.eq.s32.totalorder %s32, 0
      %p157 = por %p155, %p156
      %p158 = scmp.ne.s32.totalorder %s150, %s152
      %p159 = scmp.eq.s32.totalorder %s37, 1
      %p160 = por %p158, %p159
      %p161 = scmp.ne.s32.totalorder %s152, %s153
      %p162 = scmp.eq.s32.totalorder %s37, 0
      %p163 = por %p161, %p162
      %p164 = scmp.ne.s32.totalorder %s152, %s153
      %p165 = scmp.eq.s32.totalorder %s38, 1
      %p166 = por %p164, %p165
      %p168 = scmp.ne.s32.totalorder %s153, %s167
      %p169 = scmp.eq.s32.totalorder %s38, 0
      %p170 = por %p168, %p169
      %s172 = sadd.s32 %s171, 1
      %p175 = scmp.eq.s32.totalorder %s32, 1
      %p176 = scmp.ne.s32.totalorder %s171, %s173
      %p177 = scmp.eq.s32.totalorder %s32, 0
      %p178 = por %p176, %p177
      %p179 = scmp.ne.s32.totalorder %s171, %s173
      %p180 = scmp.eq.s32.totalorder %s37, 1
      %p181 = por %p179, %p180
      %p182 = scmp.ne.s32.totalorder %s173, %s174
      %p183 = scmp.eq.s32.totalorder %s37, 0
      %p184 = por %p182, %p183
      %p185 = scmp.ne.s32.totalorder %s173, %s174
      %p186 = scmp.eq.s32.totalorder %s38, 1
      %p187 = por %p185, %p186
      %p189 = scmp.ne.s32.totalorder %s174, %s188
      %p190 = scmp.eq.s32.totalorder %s38, 0
      %p191 = por %p189, %p190
      %s193 = sadd.s32 %s192, 1
      %p196 = scmp.eq.s32.totalorder %s32, 1
      %p197 = scmp.ne.s32.totalorder %s192, %s194
      %p198 = scmp.eq.s32.totalorder %s32, 0
      %p199 = por %p197, %p198
      %p200 = scmp.ne.s32.totalorder %s192, %s194
      %p201 = scmp.eq.s32.totalorder %s37, 1
      %p202 = por %p200, %p201
      %p203 = scmp.ne.s32.totalorder %s194, %s195
      %p204 = scmp.eq.s32.totalorder %s37, 0
      %p205 = por %p203, %p204
      %p206 = scmp.ne.s32.totalorder %s194, %s195
      %p207 = scmp.eq.s32.totalorder %s38, 1
      %p208 = por %p206, %p207
      %p210 = scmp.ne.s32.totalorder %s195, %s209
      %p211 = scmp.eq.s32.totalorder %s38, 0
      %p212 = por %p210, %p211
      %s214 = sadd.s32 %s213, 1
      %p217 = scmp.eq.s32.totalorder %s32, 1
      %p218 = scmp.ne.s32.totalorder %s213, %s215
      %p219 = scmp.eq.s32.totalorder %s32, 0
      %p220 = por %p218, %p219
      %p221 = scmp.ne.s32.totalorder %s213, %s215
      %p222 = scmp.eq.s32.totalorder %s37, 1
      %p223 = por %p221, %p222
      %p224 = scmp.ne.s32.totalorder %s215, %s216
      %p225 = scmp.eq.s32.totalorder %s37, 0
      %p226 = por %p224, %p225
      %p227 = scmp.ne.s32.totalorder %s215, %s216
      %p228 = scmp.eq.s32.totalorder %s38, 1
      %p229 = por %p227, %p228
      %p231 = scmp.ne.s32.totalorder %s216, %s230
      %p232 = scmp.eq.s32.totalorder %s38, 0
      %p233 = por %p231, %p232
      %s235 = sadd.s32 %s234, 1
      %p238 = scmp.eq.s32.totalorder %s32, 1
      %p239 = scmp.ne.s32.totalorder %s234, %s236
      %p240 = scmp.eq.s32.totalorder %s32, 0
      %p241 = por %p239, %p240
      %p242 = scmp.ne.s32.totalorder %s234, %s236
      %p243 = scmp.eq.s32.totalorder %s37, 1
      %p244 = por %p242, %p243
      %p245 = scmp.ne.s32.totalorder %s236, %s237
      %p246 = scmp.eq.s32.totalorder %s37, 0
      %p247 = por %p245, %p246
      %p248 = scmp.ne.s32.totalorder %s236, %s237
      %p249 = scmp.eq.s32.totalorder %s38, 1
      %p250 = por %p248, %p249
      %p252 = scmp.ne.s32.totalorder %s237, %s251
      %p253 = scmp.eq.s32.totalorder %s38, 0
      %p254 = por %p252, %p253
      %s256 = sadd.s32 %s255, 1
      %p259 = scmp.eq.s32.totalorder %s32, 1
      %p260 = scmp.ne.s32.totalorder %s255, %s257
      %p261 = scmp.eq.s32.totalorder %s32, 0
      %p262 = por %p260, %p261
      %p263 = scmp.ne.s32.totalorder %s255, %s257
      %p264 = scmp.eq.s32.totalorder %s37, 1
      %p265 = por %p263, %p264
      %p266 = scmp.ne.s32.totalorder %s257, %s258
      %p267 = scmp.eq.s32.totalorder %s37, 0
      %p268 = por %p266, %p267
      %p269 = scmp.ne.s32.totalorder %s257, %s258
      %p270 = scmp.eq.s32.totalorder %s38, 1
      %p271 = por %p269, %p270
      %p273 = scmp.ne.s32.totalorder %s258, %s272
      %p274 = scmp.eq.s32.totalorder %s38, 0
      %p275 = por %p273, %p274
      %s277 = sadd.s32 %s276, 1
      %p280 = scmp.eq.s32.totalorder %s32, 1
      %p281 = scmp.ne.s32.totalorder %s276, %s278
      %p282 = scmp.eq.s32.totalorder %s32, 0
      %p283 = por %p281, %p282
      %p284 = scmp.ne.s32.totalorder %s276, %s278
      %p285 = scmp.eq.s32.totalorder %s37, 1
      %p286 = por %p284, %p285
      %p287 = scmp.ne.s32.totalorder %s278, %s279
      %p288 = scmp.eq.s32.totalorder %s37, 0
      %p289 = por %p287, %p288
      %p290 = scmp.ne.s32.totalorder %s278, %s279
      %p291 = scmp.eq.s32.totalorder %s38, 1
      %p292 = por %p290, %p291
      %p294 = scmp.ne.s32.totalorder %s279, %s293
      %p295 = scmp.eq.s32.totalorder %s38, 0
      %p296 = por %p294, %p295
      %s298 = sadd.s32 %s297, 1
      %p301 = scmp.eq.s32.totalorder %s32, 1
      %p302 = scmp.ne.s32.totalorder %s297, %s299
      %p303 = scmp.eq.s32.totalorder %s32, 0
      %p304 = por %p302, %p303
      %p305 = scmp.ne.s32.totalorder %s297, %s299
      %p306 = scmp.eq.s32.totalorder %s37, 1
      %p307 = por %p305, %p306
      %p308 = scmp.ne.s32.totalorder %s299, %s300
      %p309 = scmp.eq.s32.totalorder %s37, 0
      %p310 = por %p308, %p309
      %p311 = scmp.ne.s32.totalorder %s299, %s300
      %p312 = scmp.eq.s32.totalorder %s38, 1
      %p313 = por %p311, %p312
      %p315 = scmp.ne.s32.totalorder %s300, %s314
      %p316 = scmp.eq.s32.totalorder %s38, 0
      %p317 = por %p315, %p316
      %s319 = sadd.s32 %s318, 1
      %p322 = scmp.eq.s32.totalorder %s32, 1
      %p323 = scmp.ne.s32.totalorder %s318, %s320
      %p324 = scmp.eq.s32.totalorder %s32, 0
      %p325 = por %p323, %p324
      %p326 = scmp.ne.s32.totalorder %s318, %s320
      %p327 = scmp.eq.s32.totalorder %s37, 1
      %p328 = por %p326, %p327
      %p329 = scmp.ne.s32.totalorder %s320, %s321
      %p330 = scmp.eq.s32.totalorder %s37, 0
      %p331 = por %p329, %p330
      %p332 = scmp.ne.s32.totalorder %s320, %s321
      %p333 = scmp.eq.s32.totalorder %s38, 1
      %p334 = por %p332, %p333
      %p336 = scmp.ne.s32.totalorder %s321, %s335
      %p337 = scmp.eq.s32.totalorder %s38, 0
      %p338 = por %p336, %p337
      %s340 = sadd.s32 %s339, 1
      %p343 = scmp.eq.s32.totalorder %s32, 1
      %p344 = scmp.ne.s32.totalorder %s339, %s341
      %p345 = scmp.eq.s32.totalorder %s32, 0
      %p346 = por %p344, %p345
      %p347 = scmp.ne.s32.totalorder %s339, %s341
      %p348 = scmp.eq.s32.totalorder %s37, 1
      %p349 = por %p347, %p348
      %p350 = scmp.ne.s32.totalorder %s341, %s342
      %p351 = scmp.eq.s32.totalorder %s37, 0
      %p352 = por %p350, %p351
      %p353 = scmp.ne.s32.totalorder %s341, %s342
      %p354 = scmp.eq.s32.totalorder %s38, 1
      %p355 = por %p353, %p354
      %p357 = scmp.ne.s32.totalorder %s342, %s356
      %p358 = scmp.eq.s32.totalorder %s38, 0
      %p359 = por %p357, %p358
      %s360 = ssub.s32 %s39, %s51
      %s361 = ssub.s32 %s40, %s47
      %s362 = sor.u32 %s360, %s361
      %p363 = scmp.eq.s32.totalorder %s362, 0
      %s365 = sadd.s32 %s364, 1
      %s366 = scalar_select %p363, %s364, %s365
      %p369 = pneg %p363
      %p370 = scmp.eq.s32.totalorder %s32, 1
      %p371 = por %p369, %p370
      %p372 = scmp.ne.s32.totalorder %s364, %s367
      %p373 = scmp.eq.s32.totalorder %s32, 0
      %p374 = por %p372, %p373
      %p375 = scmp.ne.s32.totalorder %s364, %s367
      %p376 = scmp.eq.s32.totalorder %s37, 1
      %p377 = por %p375, %p376
      %p378 = scmp.ne.s32.totalorder %s367, %s368
      %p379 = scmp.eq.s32.totalorder %s37, 0
      %p380 = por %p378, %p379
      %p381 = scmp.ne.s32.totalorder %s367, %s368
      %p382 = scmp.eq.s32.totalorder %s38, 1
      %p383 = por %p381, %p382
      %p385 = scmp.ne.s32.totalorder %s368, %s384
      %p386 = scmp.eq.s32.totalorder %s38, 0
      %p387 = por %p385, %p386
      %s388 = ssub.s32 %s39, %s51
      %s389 = ssub.s32 %s40, %s47
      %s390 = sor.u32 %s388, %s389
      %p391 = scmp.eq.s32.totalorder %s390, 0
      %s393 = sadd.s32 %s392, 1
      %s394 = scalar_select %p391, %s392, %s393
      %p397 = pneg %p391
      %p398 = scmp.eq.s32.totalorder %s32, 1
      %p399 = por %p397, %p398
      %p400 = scmp.ne.s32.totalorder %s392, %s395
      %p401 = scmp.eq.s32.totalorder %s32, 0
      %p402 = por %p400, %p401
      %p403 = scmp.ne.s32.totalorder %s392, %s395
      %p404 = scmp.eq.s32.totalorder %s37, 1
      %p405 = por %p403, %p404
      %p406 = scmp.ne.s32.totalorder %s395, %s396
      %p407 = scmp.eq.s32.totalorder %s37, 0
      %p408 = por %p406, %p407
      %p409 = scmp.ne.s32.totalorder %s395, %s396
      %p410 = scmp.eq.s32.totalorder %s38, 1
      %p411 = por %p409, %p410
      %p413 = scmp.ne.s32.totalorder %s396, %s412
      %p414 = scmp.eq.s32.totalorder %s38, 0
      %p415 = por %p413, %p414
      %p416 = scmp.le.s32.totalorder 1, %s32
      %p417 = scmp.lt.s32.totalorder %s32, 3
      %p418 = pnand %p416, %p417
      %p419 = pneg %p418
      // Predicated region
      $region9: #{tpu_custom_call.1} parent=5 // pred_check
        _
      $region10: #{tpu_custom_call.1} parent=5 // pred_check_branch
        %421 = sbr.rel (%p418) target = $region12
      $region11: #{tpu_custom_call.1} parent=5 // pred_region
        %s422 = ssub.s32 %s32, 1
        // Predicated region
        $region13: #{tpu_custom_call.1} parent=11 // pred_check
          %p423 = pneg %p121
        $region14: #{tpu_custom_call.1} parent=11 // pred_check_branch
          %425 = sbr.rel (%p423) target = $region16
        $region15: #{tpu_custom_call.1} parent=11 // pred_region
          %s427 = ssub.s32 256, 256
          %428 = vsyncadd [#allocation7], %s427
          %s429 = sshll.u32 [#allocation6], 4
          %s430 = int_to_ptr.vmem [resolvable:$true] %s429
          %435 = dma.hbm_to_vmem [thread:$0]  %s2, 256, %s430, [#allocation7], 64, 64, 4
        $region16: #{tpu_custom_call.1} parent=11 // pred_fallthru
          _
        // Predicated region
        $region17: #{tpu_custom_call.1} parent=11 // pred_check
          %p436 = pneg %p142
        $region18: #{tpu_custom_call.1} parent=11 // pred_check_branch
          %438 = sbr.rel (%p436) target = $region20
        $region19: #{tpu_custom_call.1} parent=11 // pred_region
          %s440 = ssub.s32 16, 16
          %441 = vsyncadd [#allocation7], %s440
          %s443 = sshll.u32 [#allocation8], 4
          %s444 = int_to_ptr.vmem [resolvable:$true] %s443
          %446 = dma.hbm_to_vmem [thread:$0]  %s3, 16, %s444, [#allocation7]
        $region20: #{tpu_custom_call.1} parent=11 // pred_fallthru
          _
        // Predicated region
        $region21: #{tpu_custom_call.1} parent=11 // pred_check
          %p447 = pneg %p163
        $region22: #{tpu_custom_call.1} parent=11 // pred_check_branch
          %449 = sbr.rel (%p447) target = $region24
        $region23: #{tpu_custom_call.1} parent=11 // pred_region
          _
        $region24: #{tpu_custom_call.1} parent=11 // pred_fallthru
          _
        // Predicated region
        $region25: #{tpu_custom_call.1} parent=11 // pred_check
          %p450 = pneg %p184
        $region26: #{tpu_custom_call.1} parent=11 // pred_check_branch
          %452 = sbr.rel (%p450) target = $region28
        $region27: #{tpu_custom_call.1} parent=11 // pred_region
          %s454 = ssub.s32 32, 32
          %455 = vsyncadd [#allocation10], %s454
          %s456 = sshll.u32 [#allocation9], 4
          %s457 = int_to_ptr.vmem [resolvable:$true] %s456
          %462 = dma.hbm_to_vmem [thread:$0]  %s5, 32, %s457, [#allocation10], 16, 16, 1
        $region28: #{tpu_custom_call.1} parent=11 // pred_fallthru
          _
        // Predicated region
        $region29: #{tpu_custom_call.1} parent=11 // pred_check
          %p463 = pneg %p205
        $region30: #{tpu_custom_call.1} parent=11 // pred_check_branch
          %465 = sbr.rel (%p463) target = $region32
        $region31: #{tpu_custom_call.1} parent=11 // pred_region
          %s467 = ssub.s32 32, 32
          %468 = vsyncadd [#allocation10], %s467
          %s469 = sshll.u32 [#allocation11], 4
          %s470 = int_to_ptr.vmem [resolvable:$true] %s469
          %475 = dma.hbm_to_vmem [thread:$0]  %s6, 32, %s470, [#allocation10], 16, 16, 1
        $region32: #{tpu_custom_call.1} parent=11 // pred_fallthru
          _
        // Predicated region
        $region33: #{tpu_custom_call.1} parent=11 // pred_check
          %p476 = pneg %p226
        $region34: #{tpu_custom_call.1} parent=11 // pred_check_branch
          %478 = sbr.rel (%p476) target = $region36
        $region35: #{tpu_custom_call.1} parent=11 // pred_region
          %s480 = ssub.s32 32, 32
          %481 = vsyncadd [#allocation13], %s480
          %s482 = sshll.u32 [#allocation12], 4
          %s483 = int_to_ptr.vmem [resolvable:$true] %s482
          %488 = dma.hbm_to_vmem [thread:$0]  %s7, 32, %s483, [#allocation13], 16, 16, 1
        $region36: #{tpu_custom_call.1} parent=11 // pred_fallthru
          _
        // Predicated region
        $region37: #{tpu_custom_call.1} parent=11 // pred_check
          %p489 = pneg %p247
        $region38: #{tpu_custom_call.1} parent=11 // pred_check_branch
          %491 = sbr.rel (%p489) target = $region40
        $region39: #{tpu_custom_call.1} parent=11 // pred_region
          %s493 = ssub.s32 512, 512
          %494 = vsyncadd [#allocation13], %s493
          %s495 = sshll.u32 [#allocation14], 4
          %s496 = int_to_ptr.vmem [resolvable:$true] %s495
          %501 = dma.hbm_to_vmem [thread:$0]  %s8, 512, %s496, [#allocation13], 64, 64, 4
        $region40: #{tpu_custom_call.1} parent=11 // pred_fallthru
          _
        // Predicated region
        $region41: #{tpu_custom_call.1} parent=11 // pred_check
          %p502 = pneg %p268
        $region42: #{tpu_custom_call.1} parent=11 // pred_check_branch
          %504 = sbr.rel (%p502) target = $region44
        $region43: #{tpu_custom_call.1} parent=11 // pred_region
          %s506 = ssub.s32 32, 32
          %507 = vsyncadd [#allocation16], %s506
          %s508 = sshll.u32 [#allocation15], 4
          %s509 = int_to_ptr.vmem [resolvable:$true] %s508
          %514 = dma.hbm_to_vmem [thread:$0]  %s9, 32, %s509, [#allocation16], 16, 16, 1
        $region44: #{tpu_custom_call.1} parent=11 // pred_fallthru
          _
        // Predicated region
        $region45: #{tpu_custom_call.1} parent=11 // pred_check
          %p515 = pneg %p289
        $region46: #{tpu_custom_call.1} parent=11 // pred_check_branch
          %517 = sbr.rel (%p515) target = $region48
        $region47: #{tpu_custom_call.1} parent=11 // pred_region
          _
        $region48: #{tpu_custom_call.1} parent=11 // pred_fallthru
          _
        // Predicated region
        $region49: #{tpu_custom_call.1} parent=11 // pred_check
          %p518 = pneg %p310
        $region50: #{tpu_custom_call.1} parent=11 // pred_check_branch
          %520 = sbr.rel (%p518) target = $region52
        $region51: #{tpu_custom_call.1} parent=11 // pred_region
          _
        $region52: #{tpu_custom_call.1} parent=11 // pred_fallthru
          _
        // Predicated region
        $region53: #{tpu_custom_call.1} parent=11 // pred_check
          %p521 = pneg %p331
        $region54: #{tpu_custom_call.1} parent=11 // pred_check_branch
          %523 = sbr.rel (%p521) target = $region56
        $region55: #{tpu_custom_call.1} parent=11 // pred_region
          %s525 = ssub.s32 256, 256
          %526 = vsyncadd [#allocation16], %s525
          %s527 = sshll.u32 [#allocation17], 4
          %s528 = int_to_ptr.vmem [resolvable:$true] %s527
          %533 = dma.hbm_to_vmem [thread:$0]  %s12, 256, %s528, [#allocation16], 64, 64, 4
        $region56: #{tpu_custom_call.1} parent=11 // pred_fallthru
          _
        // Predicated region
        $region57: #{tpu_custom_call.1} parent=11 // pred_check
          %p534 = pneg %p352
        $region58: #{tpu_custom_call.1} parent=11 // pred_check_branch
          %536 = sbr.rel (%p534) target = $region60
        $region59: #{tpu_custom_call.1} parent=11 // pred_region
          _
        $region60: #{tpu_custom_call.1} parent=11 // pred_fallthru
          _
      $region12: #{tpu_custom_call.1} parent=5 // pred_fallthru
        _
      %p537 = scmp.lt.s32.totalorder %s32, 2
      // Predicated region
      $region61: #{tpu_custom_call.1} parent=5 // pred_check
        %p538 = pneg %p537
      $region62: #{tpu_custom_call.1} parent=5 // pred_check_branch
        %540 = sbr.rel (%p538) target = $region64
      $region63: #{tpu_custom_call.1} parent=5 // pred_region
        // Predicated region
        $region65: #{tpu_custom_call.1} parent=63 // pred_check
          %p541 = pneg %p66
        $region66: #{tpu_custom_call.1} parent=63 // pred_check_branch
          %543 = sbr.rel (%p541) target = $region68
        $region67: #{tpu_custom_call.1} parent=63 // pred_region
          %s544 = sand.u32 %s56, 1
          %s545 = scalar_lea.sflag [#allocation4], %s544
          %s546 = sand.u32 %s56, 1
          %s547 = smul.addr %s546, 32
          %s548 = scalar_lea.vmem [#allocation3], %s547
          %s550 = ssub.s32 512, 512
          %551 = vsyncadd %s545, %s550
          %s552 = smul.addr %s40, 4
          %s553 = smul.addr %s39, 4
          %s554 = sadd.s32 %s552, %s553
          %s555 = smul.addr %s554, 128
          %s556 = scalar_lea.hbm %s0, %s555
          %s557 = sshll.u32 %s548, 4
          %s558 = int_to_ptr.vmem [resolvable:$true] %s557
          %563 = dma.hbm_to_vmem [thread:$0]  %s556, 512, %s558, %s545, 128, 128, 8
        $region68: #{tpu_custom_call.1} parent=63 // pred_fallthru
          _
        // Predicated region
        $region69: #{tpu_custom_call.1} parent=63 // pred_check
          %p564 = pneg %p94
        $region70: #{tpu_custom_call.1} parent=63 // pred_check_branch
          %566 = sbr.rel (%p564) target = $region72
        $region71: #{tpu_custom_call.1} parent=63 // pred_region
          %p567 = scmp.lt.s32.totalorder %s39, 1
          %s568 = scalar_select %p567, %s39, 1
          %p569 = scmp.lt.s32.totalorder %s40, 0
          %s570 = scalar_select %p569, %s40, 0
          %s571 = smul.addr %s570, 4
          %s572 = smul.addr %s568, 4
          %s573 = sadd.s32 %s571, %s572
          %s574 = smul.addr %s573, 4
          %s575 = scalar_lea.vmem %s1, %s574
        $region72: #{tpu_custom_call.1} parent=63 // pred_fallthru
          _
      $region64: #{tpu_custom_call.1} parent=5 // pred_fallthru
        _
      %p576 = scmp.le.s32.totalorder 1, %s32
      %p577 = scmp.lt.s32.totalorder %s32, 3
      %p578 = pnand %p576, %p577
      %p579 = pneg %p578
      // Predicated region
      $region73: #{tpu_custom_call.1} parent=5 // pred_check
        _
      $region74: #{tpu_custom_call.1} parent=5 // pred_check_branch
        %581 = sbr.rel (%p578) target = $region76
      $region75: #{tpu_custom_call.1} parent=5 // pred_region
        %s582 = ssub.s32 %s32, 1
        %s583 = sand.u32 %s59, 1
        %s584 = scalar_lea.sflag [#allocation4], %s583
        %s585 = sand.u32 %s59, 1
        %s586 = smul.addr %s585, 32
        %s587 = scalar_lea.vmem [#allocation3], %s586
        // Predicated region
        $region77: #{tpu_custom_call.1} parent=75 // pred_check
          %p588 = pneg %p72
        $region78: #{tpu_custom_call.1} parent=75 // pred_check_branch
          %590 = sbr.rel (%p588) target = $region80
        $region79: #{tpu_custom_call.1} parent=75 // pred_region
          %591 = dma.done %s584, 512
        $region80: #{tpu_custom_call.1} parent=75 // pred_fallthru
          _
        // Predicated region
        $region81: #{tpu_custom_call.1} parent=75 // pred_check
          %p592 = pneg %p121
        $region82: #{tpu_custom_call.1} parent=75 // pred_check_branch
          %594 = sbr.rel (%p592) target = $region84
        $region83: #{tpu_custom_call.1} parent=75 // pred_region
          %595 = dma.done [#allocation7], 256
        $region84: #{tpu_custom_call.1} parent=75 // pred_fallthru
          _
        // Predicated region
        $region85: #{tpu_custom_call.1} parent=75 // pred_check
          %p596 = pneg %p142
        $region86: #{tpu_custom_call.1} parent=75 // pred_check_branch
          %598 = sbr.rel (%p596) target = $region88
        $region87: #{tpu_custom_call.1} parent=75 // pred_region
          %599 = dma.done [#allocation7], 16
        $region88: #{tpu_custom_call.1} parent=75 // pred_fallthru
          _
        // Predicated region
        $region89: #{tpu_custom_call.1} parent=75 // pred_check
          %p600 = pneg %p184
        $region90: #{tpu_custom_call.1} parent=75 // pred_check_branch
          %602 = sbr.rel (%p600) target = $region92
        $region91: #{tpu_custom_call.1} parent=75 // pred_region
          %603 = dma.done [#allocation10], 32
        $region92: #{tpu_custom_call.1} parent=75 // pred_fallthru
          _
        // Predicated region
        $region93: #{tpu_custom_call.1} parent=75 // pred_check
          %p604 = pneg %p205
        $region94: #{tpu_custom_call.1} parent=75 // pred_check_branch
          %606 = sbr.rel (%p604) target = $region96
        $region95: #{tpu_custom_call.1} parent=75 // pred_region
          %607 = dma.done [#allocation10], 32
        $region96: #{tpu_custom_call.1} parent=75 // pred_fallthru
          _
        // Predicated region
        $region97: #{tpu_custom_call.1} parent=75 // pred_check
          %p608 = pneg %p226
        $region98: #{tpu_custom_call.1} parent=75 // pred_check_branch
          %610 = sbr.rel (%p608) target = $region100
        $region99: #{tpu_custom_call.1} parent=75 // pred_region
          %611 = dma.done [#allocation13], 32
        $region100: #{tpu_custom_call.1} parent=75 // pred_fallthru
          _
        // Predicated region
        $region101: #{tpu_custom_call.1} parent=75 // pred_check
          %p612 = pneg %p247
        $region102: #{tpu_custom_call.1} parent=75 // pred_check_branch
          %614 = sbr.rel (%p612) target = $region104
        $region103: #{tpu_custom_call.1} parent=75 // pred_region
          %615 = dma.done [#allocation13], 512
        $region104: #{tpu_custom_call.1} parent=75 // pred_fallthru
          _
        // Predicated region
        $region105: #{tpu_custom_call.1} parent=75 // pred_check
          %p616 = pneg %p268
        $region106: #{tpu_custom_call.1} parent=75 // pred_check_branch
          %618 = sbr.rel (%p616) target = $region108
        $region107: #{tpu_custom_call.1} parent=75 // pred_region
          %619 = dma.done [#allocation16], 32
        $region108: #{tpu_custom_call.1} parent=75 // pred_fallthru
          _
        // Predicated region
        $region109: #{tpu_custom_call.1} parent=75 // pred_check
          %p620 = pneg %p331
        $region110: #{tpu_custom_call.1} parent=75 // pred_check_branch
          %622 = sbr.rel (%p620) target = $region112
        $region111: #{tpu_custom_call.1} parent=75 // pred_region
          %623 = dma.done [#allocation16], 256
        $region112: #{tpu_custom_call.1} parent=75 // pred_fallthru
          _
        %s624 = sand.u32 %s59, 1
        %s625 = scalar_lea.sflag [#allocation4], %s624
        %s626 = sand.u32 %s59, 1
        %s627 = smul.addr %s626, 32
        %s628 = scalar_lea.vmem [#allocation3], %s627
        %p629 = pneg %p72
        %p630 = pneg %p69
        %p631 = scmp.lt.s32.totalorder %s41, 1
        %s632 = scalar_select %p631, %s41, 1
        %p633 = scmp.lt.s32.totalorder %s42, 0
        %s634 = scalar_select %p633, %s42, 0
        %s635 = smul.addr %s634, 4
        %s636 = smul.addr %s632, 4
        %s637 = sadd.s32 %s635, %s636
        %s638 = smul.addr %s637, 4
        %s639 = scalar_lea.vmem %s1, %s638
        %p640 = pneg %p100
        %p641 = pneg %p97
        %p642 = pneg %p121
        %p643 = pneg %p118
        %p644 = pneg %p142
        %p645 = pneg %p139
        %p646 = pneg %p163
        %p647 = pneg %p160
        %p648 = pneg %p184
        %p649 = pneg %p181
        %p650 = pneg %p205
        %p651 = pneg %p202
        %p652 = pneg %p226
        %p653 = pneg %p223
        %p654 = pneg %p247
        %p655 = pneg %p244
        %p656 = pneg %p268
        %p657 = pneg %p265
        %p658 = pneg %p289
        %p659 = pneg %p286
        %p660 = pneg %p310
        %p661 = pneg %p307
        %p662 = pneg %p331
        %p663 = pneg %p328
        %p664 = pneg %p352
        %p665 = pneg %p349
        %p666 = pneg %p380
        %p667 = pneg %p377
        %s668 = sand.u32 %s367, 1
        %s669 = scalar_lea.sflag [#allocation5], %s668
        %s670 = sand.u32 %s367, 1
        %s671 = smul.addr %s670, 8
        %s672 = scalar_lea.vmem [#allocation18], %s671
        %p673 = pneg %p408
        %p674 = pneg %p405
        %p675 = scmp.lt.s32.totalorder %s41, 1
        %s676 = scalar_select %p675, %s41, 1
        %p677 = scmp.lt.s32.totalorder %s42, 0
        %s678 = scalar_select %p677, %s42, 0
        %s679 = smul.addr %s678, 2
        %s680 = smul.addr %s676, 2
        %s681 = sadd.s32 %s679, %s680
        %s682 = smul.addr %s681, 8
        %s683 = scalar_lea.vmem %s15, %s682
        %p684 = scmp.lt.s32.totalorder %s41, 1
        %s685 = scalar_select %p684, %s41, 1
        %p686 = scmp.lt.s32.totalorder %s42, 0
        %s687 = scalar_select %p686, %s42, 0
        %s688 = smul.addr %s687, 4
        %s689 = smul.addr %s685, 4
        %s690 = sadd.s32 %s688, %s689
        %s691 = smul.addr %s690, 4
        %s692 = scalar_lea.vmem %s1, %s691
        %p693 = scmp.lt.s32.totalorder %s41, 1
        %s694 = scalar_select %p693, %s41, 1
        %p695 = scmp.lt.s32.totalorder %s42, 0
        %s696 = scalar_select %p695, %s42, 0
        %s697 = smul.addr %s696, 2
        %s698 = smul.addr %s694, 2
        %s699 = sadd.s32 %s697, %s698
        %s700 = smul.addr %s699, 8
        %s701 = scalar_lea.vmem %s15, %s700
        %v703 = vlaneseq
        %v704 = vshrl.u32 %v703, 7
        %v705 = vadd.s32 %v704, 8
        %v706 = vadd.s32 %v704, 16
        %v707 = vadd.s32 %v704, 24
        %s708 = smul.u32 %s42, 16
        %s709 = ssub.s32 %s708, 8
        %v710 = vstv %s709
        %v711 = vadd.s32 %v704, %v710
        %v712 = vadd.s32 %v705, %v710
        %v713 = vadd.s32 %v706, %v710
        %v714 = vadd.s32 %v707, %v710
        %vm715 = vcmp.ge.s32.totalorder %v711, 0
        %vm716 = vcmp.ge.s32.totalorder %v712, 0
        %vm717 = vcmp.ge.s32.totalorder %v713, 0
        %vm718 = vcmp.ge.s32.totalorder %v714, 0
        %vm719 = vcmp.lt.s32.totalorder %v711, 16
        %vm720 = vcmp.lt.s32.totalorder %v712, 16
        %vm721 = vcmp.lt.s32.totalorder %v713, 16
        %vm722 = vcmp.lt.s32.totalorder %v714, 16
        %vm723 = vmand %vm715, %vm719
        %vm724 = vmand %vm716, %vm720
        %vm725 = vmand %vm717, %vm721
        %vm726 = vmand %vm718, %vm722
        %vm727 = vcmask 261120
        %728 = vst.msk [vmem:[#allocation2] sm:$0xff] %vm727, 0.0
        %729 = vst.msk [vmem:[#allocation2 + $0x28] sm:$0xff] %vm727, 0.0
        %v730 = vld [vmem:[%s587] sm:$0xff]
        %v731 = vld [vmem:[%s587 + $0x8] sm:$0xff]
        %v732 = vld [vmem:[%s587 + $0x10] sm:$0xff]
        %v733 = vld [vmem:[%s587 + $0x18] sm:$0xff]
        %v734 = vld [vmem:[%s692] sm:$0xf]
        %v735 = vld [vmem:[%s692 + $0x4] sm:$0xf]
        %v736 = vld [vmem:[%s692 + $0x8] sm:$0xf]
        %v737 = vld [vmem:[%s692 + $0xc] sm:$0xf]
        %v738 = vld [vmem:[#allocation6] sm:$0xf]
        %v739 = vld [vmem:[#allocation6 + $0x4] sm:$0xf]
        %v740 = vld [vmem:[#allocation6 + $0x8] sm:$0xf]
        %v741 = vld [vmem:[#allocation6 + $0xc] sm:$0xf]
        %v746 = vunpack.c.l.b16 %v734
        %v747 = vunpack.c.l.b16 %v735
        %v748 = vunpack.c.l.b16 %v736
        %v749 = vunpack.c.l.b16 %v737
        %v750 = vpack.c.b16 %v747, %v746
        %v751 = vpack.c.b16 %v749, %v748
        %v756 = vunpack.c.l.b16 %v738
        %v757 = vunpack.c.l.b16 %v739
        %v758 = vunpack.c.l.b16 %v740
        %v759 = vunpack.c.l.b16 %v741
        %v760 = vpack.c.b16 %v757, %v756
        %v761 = vpack.c.b16 %v759, %v758
        %v765 = vsel %vm727, %v750, 0
        %v768 = vsel %vm727, %v751, 0
        %770 = vmatprep.subr.bf16.mxu0 0
        %771 = vmatpush1.bf16.msra.mxu0 %v760
        %772 = vmatprep.subr.bf16.mxu0 0
        %773 = vmatpush1.bf16.msra.mxu0 %v761
        %774 = vmatprep.subr.bf16.mxu0 0
        %775 = vmatpush1.bf16.msra.mxu0 0
        %776 = vmatprep.subr.bf16.mxu0 0
        %777 = vmatpush1.bf16.msra.mxu0 0
        %778 = vmatprep.subr.bf16.mxu0 0
        %779 = vmatpush1.bf16.msra.mxu0 0
        %780 = vmatprep.subr.bf16.mxu0 0
        %781 = vmatpush1.bf16.msra.mxu0 0
        %782 = vmatprep.subr.bf16.mxu0 0
        %783 = vmatpush1.bf16.msra.mxu0 0
        %784 = vmatprep.subr.bf16.mxu0 0
        %785 = vmatpush1.bf16.msra.mxu0 0
        %786 = vmatprep.subr.bf16.mxu0 0
        %787 = vmatpush1.bf16.msra.mxu0 0
        %788 = vmatprep.subr.bf16.mxu0 0
        %789 = vmatpush1.bf16.msra.mxu0 0
        %790 = vmatprep.subr.bf16.mxu0 0
        %791 = vmatpush1.bf16.msra.mxu0 0
        %792 = vmatprep.subr.bf16.mxu0 0
        %793 = vmatpush1.bf16.msra.mxu0 0
        %794 = vmatprep.subr.bf16.mxu0 0
        %795 = vmatpush1.bf16.msra.mxu0 0
        %796 = vmatprep.subr.bf16.mxu0 0
        %797 = vmatpush1.bf16.msra.mxu0 0
        %798 = vmatprep.subr.bf16.mxu0 0
        %799 = vmatpush1.bf16.msra.mxu0 0
        %800 = vmatprep.subr.bf16.mxu0 0
        %801 = vmatpush1.bf16.msra.mxu0 0
        %802 = vmatprep.mubr.bf16.mxu0 0
        %803 = vmatmul.mubr.bf16.gmra.mrb[0].mxu0 %v765
        %v804 = vpop.f32.mrb[0].mxu0
        %v805 = vadd.f32 0.0, %v804
        %v806 = vpop.f32.mrb[0].mxu0
        %v807 = vpop.f32.mrb[0].mxu0
        %v808 = vadd.f32 0.0, %v807
        %v809 = vpop.f32.mrb[0].mxu0
        %810 = vmatprep.mubr.bf16.mxu0 0
        %811 = vmatmul.mubr.bf16.gmra.mrb[0].mxu0 %v768
        %v812 = vpop.f32.mrb[0].mxu0
        %v813 = vadd.f32 0.0, %v812
        %v814 = vpop.f32.mrb[0].mxu0
        %v815 = vpop.f32.mrb[0].mxu0
        %v816 = vadd.f32 0.0, %v815
        %v817 = vpop.f32.mrb[0].mxu0
        %818 = vdwg.mxu0
        %v819 = vadd.f32 %v730, %v805
        %v820 = vadd.f32 %v731, %v808
        %v821 = vadd.f32 %v732, %v813
        %v822 = vadd.f32 %v733, %v816
        %v823 = vld [vmem:[#allocation8] sm:$0x1]
        %v825 = vlaneseq
        %v826 = vshrl.u32 %v825, 7
        %v827 = vsub.s32 0, %v826
        %v828 = vrot.slane %v823, %v827
        %v830 = vadd.f32 %v819, %v828
        %v831 = vadd.f32 %v820, %v828
        %v832 = vadd.f32 %v821, %v828
        %v833 = vadd.f32 %v822, %v828
        %v834 = vsel %vm723, 1, 0
        %v835 = vsel %vm724, 1, 0
        %v836 = vsel %vm725, 1, 0
        %v837 = vsel %vm726, 1, 0
        %vm838 = vcmp.eq.s32.totalorder %v834, 1
        %vm839 = vcmp.eq.s32.totalorder %v835, 1
        %vm840 = vcmp.eq.s32.totalorder %v836, 1
        %vm841 = vcmp.eq.s32.totalorder %v837, 1
        %v842 = vsel %vm838, %v830, 0.0
        %v843 = vsel %vm839, %v831, 0.0
        %v844 = vsel %vm840, %v832, 0.0
        %v845 = vsel %vm841, %v833, 0.0
        %846 = vst.msk [vmem:[#allocation2 + $0x8] sm:$0xff] %vm727, %v842
        %847 = vst.msk [vmem:[#allocation2 + $0x10] sm:$0xff] %vm727, %v843
        %848 = vst.msk [vmem:[#allocation2 + $0x18] sm:$0xff] %vm727, %v844
        %849 = vst.msk [vmem:[#allocation2 + $0x20] sm:$0xff] %vm727, %v845
        %v850 = vld [vmem:[%s4] sm:$0x7f]
        %v851 = vlaneseq
        %v852 = vshrl.u32 %v851, 7
        %v853 = vsub.s32 3, %v852
        %v854 = vrot.slane %v850, %v853
        %v855 = vmul.f32 %v842, %v854
        %v856 = vmul.f32 %v843, %v854
        %v857 = vmul.f32 %v844, %v854
        %v858 = vmul.f32 %v845, %v854
        %v859 = vld [vmem:[#allocation9] sm:$0x1]
        %v861 = vlaneseq
        %v862 = vshrl.u32 %v861, 7
        %v863 = vsub.s32 0, %v862
        %v864 = vrot.slane %v859, %v863
        %v866 = vadd.f32 %v855, %v864
        %v867 = vadd.f32 %v856, %v864
        %v868 = vadd.f32 %v857, %v864
        %v869 = vadd.f32 %v858, %v864
        %v870 = vld [vmem:[#allocation2 + $0x5] sm:$0xff]
        %v871 = vld [vmem:[#allocation2 + $0xd] sm:$0xff]
        %v872 = vld [vmem:[#allocation2 + $0x15] sm:$0xff]
        %v873 = vld [vmem:[#allocation2 + $0x1d] sm:$0xff]
        %v874 = vlaneseq
        %v875 = vshrl.u32 %v874, 7
        %v876 = vsub.s32 0, %v875
        %v877 = vrot.slane %v850, %v876
        %v878 = vmul.f32 %v870, %v877
        %v879 = vmul.f32 %v871, %v877
        %v880 = vmul.f32 %v872, %v877
        %v881 = vmul.f32 %v873, %v877
        %v882 = vadd.f32 %v866, %v878
        %v883 = vadd.f32 %v867, %v879
        %v884 = vadd.f32 %v868, %v880
        %v885 = vadd.f32 %v869, %v881
        %v886 = vld [vmem:[#allocation2 + $0x6] sm:$0xff]
        %v887 = vld [vmem:[#allocation2 + $0xe] sm:$0xff]
        %v888 = vld [vmem:[#allocation2 + $0x16] sm:$0xff]
        %v889 = vld [vmem:[#allocation2 + $0x1e] sm:$0xff]
        %v890 = vlaneseq
        %v891 = vshrl.u32 %v890, 7
        %v892 = vsub.s32 1, %v891
        %v893 = vrot.slane %v850, %v892
        %v894 = vmul.f32 %v886, %v893
        %v895 = vmul.f32 %v887, %v893
        %v896 = vmul.f32 %v888, %v893
        %v897 = vmul.f32 %v889, %v893
        %v898 = vadd.f32 %v882, %v894
        %v899 = vadd.f32 %v883, %v895
        %v900 = vadd.f32 %v884, %v896
        %v901 = vadd.f32 %v885, %v897
        %v902 = vld [vmem:[#allocation2 + $0x7] sm:$0xff]
        %v903 = vld [vmem:[#allocation2 + $0xf] sm:$0xff]
        %v904 = vld [vmem:[#allocation2 + $0x17] sm:$0xff]
        %v905 = vld [vmem:[#allocation2 + $0x1f] sm:$0xff]
        %v906 = vlaneseq
        %v907 = vshrl.u32 %v906, 7
        %v908 = vsub.s32 2, %v907
        %v909 = vrot.slane %v850, %v908
        %v910 = vmul.f32 %v902, %v909
        %v911 = vmul.f32 %v903, %v909
        %v912 = vmul.f32 %v904, %v909
        %v913 = vmul.f32 %v905, %v909
        %v914 = vadd.f32 %v898, %v910
        %v915 = vadd.f32 %v899, %v911
        %v916 = vadd.f32 %v900, %v912
        %v917 = vadd.f32 %v901, %v913
        %v918 = vld [vmem:[#allocation2 + $0x9] sm:$0xff]
        %v919 = vld [vmem:[#allocation2 + $0x11] sm:$0xff]
        %v920 = vld [vmem:[#allocation2 + $0x19] sm:$0xff]
        %v921 = vld [vmem:[#allocation2 + $0x21] sm:$0xff]
        %v922 = vlaneseq
        %v923 = vshrl.u32 %v922, 7
        %v924 = vsub.s32 4, %v923
        %v925 = vrot.slane %v850, %v924
        %v926 = vmul.f32 %v918, %v925
        %v927 = vmul.f32 %v919, %v925
        %v928 = vmul.f32 %v920, %v925
        %v929 = vmul.f32 %v921, %v925
        %v930 = vadd.f32 %v914, %v926
        %v931 = vadd.f32 %v915, %v927
        %v932 = vadd.f32 %v916, %v928
        %v933 = vadd.f32 %v917, %v929
        %v934 = vld [vmem:[#allocation2 + $0xa] sm:$0xff]
        %v935 = vld [vmem:[#allocation2 + $0x12] sm:$0xff]
        %v936 = vld [vmem:[#allocation2 + $0x1a] sm:$0xff]
        %v937 = vld [vmem:[#allocation2 + $0x22] sm:$0xff]
        %v938 = vlaneseq
        %v939 = vshrl.u32 %v938, 7
        %v940 = vsub.s32 5, %v939
        %v941 = vrot.slane %v850, %v940
        %v942 = vmul.f32 %v934, %v941
        %v943 = vmul.f32 %v935, %v941
        %v944 = vmul.f32 %v936, %v941
        %v945 = vmul.f32 %v937, %v941
        %v946 = vadd.f32 %v930, %v942
        %v947 = vadd.f32 %v931, %v943
        %v948 = vadd.f32 %v932, %v944
        %v949 = vadd.f32 %v933, %v945
        %v950 = vld [vmem:[#allocation2 + $0xb] sm:$0xff]
        %v951 = vld [vmem:[#allocation2 + $0x13] sm:$0xff]
        %v952 = vld [vmem:[#allocation2 + $0x1b] sm:$0xff]
        %v953 = vld [vmem:[#allocation2 + $0x23] sm:$0xff]
        %v954 = vlaneseq
        %v955 = vshrl.u32 %v954, 7
        %v956 = vsub.s32 6, %v955
        %v957 = vrot.slane %v850, %v956
        %v958 = vmul.f32 %v950, %v957
        %v959 = vmul.f32 %v951, %v957
        %v960 = vmul.f32 %v952, %v957
        %v961 = vmul.f32 %v953, %v957
        %v962 = vadd.f32 %v946, %v958
        %v963 = vadd.f32 %v947, %v959
        %v964 = vadd.f32 %v948, %v960
        %v965 = vadd.f32 %v949, %v961
        %v966 = vsel %vm727, %v962, 0.0
        %967 = vadd.xlane.f32.xlu0 %v966
        %v968 = vpop.xlane.xlu0 %967
        %v969 = vsel %vm727, %v963, 0.0
        %970 = vadd.xlane.f32.xlu0 %v969
        %v971 = vpop.xlane.xlu0 %970
        %v972 = vsel %vm727, %v964, 0.0
        %973 = vadd.xlane.f32.xlu0 %v972
        %v974 = vpop.xlane.xlu0 %973
        %v975 = vsel %vm727, %v965, 0.0
        %976 = vadd.xlane.f32.xlu0 %v975
        %v977 = vpop.xlane.xlu0 %976
        %v978 = vrcp.pop 32.0
        %v979 = vmul.f32 %v968, %v978
        %v980 = vmul.f32 %v971, %v978
        %v981 = vmul.f32 %v974, %v978
        %v982 = vmul.f32 %v977, %v978
        %v983 = vsub.f32 %v962, %v979
        %v984 = vsub.f32 %v963, %v980
        %v985 = vsub.f32 %v964, %v981
        %v986 = vsub.f32 %v965, %v982
        %v987 = vmul.f32 %v983, %v983
        %v988 = vmul.f32 %v984, %v984
        %v989 = vmul.f32 %v985, %v985
        %v990 = vmul.f32 %v986, %v986
        %v991 = vsel %vm727, %v987, 0.0
        %992 = vadd.xlane.f32.xlu0 %v991
        %v993 = vpop.xlane.xlu0 %992
        %v994 = vsel %vm727, %v988, 0.0
        %995 = vadd.xlane.f32.xlu0 %v994
        %v996 = vpop.xlane.xlu0 %995
        %v997 = vsel %vm727, %v989, 0.0
        %998 = vadd.xlane.f32.xlu0 %v997
        %v999 = vpop.xlane.xlu0 %998
        %v1000 = vsel %vm727, %v990, 0.0
        %1001 = vadd.xlane.f32.xlu0 %v1000
        %v1002 = vpop.xlane.xlu0 %1001
        %v1003 = vmul.f32 %v993, %v978
        %v1004 = vmul.f32 %v996, %v978
        %v1005 = vmul.f32 %v999, %v978
        %v1006 = vmul.f32 %v1002, %v978
        %v1007 = vadd.f32 %v1003, 1e-05
        %v1008 = vadd.f32 %v1004, 1e-05
        %v1009 = vadd.f32 %v1005, 1e-05
        %v1010 = vadd.f32 %v1006, 1e-05
        %v1011 = vrsqrt.pop %v1007
        %v1012 = vrsqrt.pop %v1008
        %v1013 = vrsqrt.pop %v1009
        %v1014 = vrsqrt.pop %v1010
        %v1015 = vmul.f32 %v983, %v1011
        %v1016 = vmul.f32 %v984, %v1012
        %v1017 = vmul.f32 %v985, %v1013
        %v1018 = vmul.f32 %v986, %v1014
        %v1019 = vld [vmem:[#allocation11] sm:$0x1]
        %v1021 = vlaneseq
        %v1022 = vshrl.u32 %v1021, 7
        %v1023 = vsub.s32 0, %v1022
        %v1024 = vrot.slane %v1019, %v1023
        %v1026 = vmul.f32 %v1015, %v1024
        %v1027 = vmul.f32 %v1016, %v1024
        %v1028 = vmul.f32 %v1017, %v1024
        %v1029 = vmul.f32 %v1018, %v1024
        %v1030 = vld [vmem:[#allocation12] sm:$0x1]
        %v1032 = vlaneseq
        %v1033 = vshrl.u32 %v1032, 7
        %v1034 = vsub.s32 0, %v1033
        %v1035 = vrot.slane %v1030, %v1034
        %v1037 = vadd.f32 %v1026, %v1035
        %v1038 = vadd.f32 %v1027, %v1035
        %v1039 = vadd.f32 %v1028, %v1035
        %v1040 = vadd.f32 %v1029, %v1035
        %v1041 = vpack.c.bf16 %v1038, %v1037
        %v1042 = vpack.c.bf16 %v1040, %v1039
        %v1043 = vld [vmem:[#allocation14] sm:$0xf]
        %v1044 = vld [vmem:[#allocation14 + $0x4] sm:$0xf]
        %v1045 = vld [vmem:[#allocation14 + $0x8] sm:$0xf]
        %v1046 = vld [vmem:[#allocation14 + $0xc] sm:$0xf]
        %v1047 = vld [vmem:[#allocation15] sm:$0x1]
        %v1049 = vlaneseq
        %v1050 = vshrl.u32 %v1049, 7
        %v1051 = vsub.s32 0, %v1050
        %v1052 = vrot.slane %v1047, %v1051
        %v1058 = vunpack.c.l.b16 %v1043
        %v1059 = vunpack.c.l.b16 %v1044
        %v1060 = vunpack.c.l.b16 %v1045
        %v1061 = vunpack.c.l.b16 %v1046
        %v1062 = vpack.c.b16 %v1059, %v1058
        %v1063 = vpack.c.b16 %v1061, %v1060
        %v1067 = vsel %vm727, %v1041, 0
        %v1070 = vsel %vm727, %v1042, 0
        %1072 = vmatprep.subr.bf16.mxu0 0
        %1073 = vmatpush1.bf16.msra.mxu0 %v1062
        %1074 = vmatprep.subr.bf16.mxu0 0
        %1075 = vmatpush1.bf16.msra.mxu0 %v1063
        %1076 = vmatprep.subr.bf16.mxu0 0
        %1077 = vmatpush1.bf16.msra.mxu0 0
        %1078 = vmatprep.subr.bf16.mxu0 0
        %1079 = vmatpush1.bf16.msra.mxu0 0
        %1080 = vmatprep.subr.bf16.mxu0 0
        %1081 = vmatpush1.bf16.msra.mxu0 0
        %1082 = vmatprep.subr.bf16.mxu0 0
        %1083 = vmatpush1.bf16.msra.mxu0 0
        %1084 = vmatprep.subr.bf16.mxu0 0
        %1085 = vmatpush1.bf16.msra.mxu0 0
        %1086 = vmatprep.subr.bf16.mxu0 0
        %1087 = vmatpush1.bf16.msra.mxu0 0
        %1088 = vmatprep.subr.bf16.mxu0 0
        %1089 = vmatpush1.bf16.msra.mxu0 0
        %1090 = vmatprep.subr.bf16.mxu0 0
        %1091 = vmatpush1.bf16.msra.mxu0 0
        %1092 = vmatprep.subr.bf16.mxu0 0
        %1093 = vmatpush1.bf16.msra.mxu0 0
        %1094 = vmatprep.subr.bf16.mxu0 0
        %1095 = vmatpush1.bf16.msra.mxu0 0
        %1096 = vmatprep.subr.bf16.mxu0 0
        %1097 = vmatpush1.bf16.msra.mxu0 0
        %1098 = vmatprep.subr.bf16.mxu0 0
        %1099 = vmatpush1.bf16.msra.mxu0 0
        %1100 = vmatprep.subr.bf16.mxu0 0
        %1101 = vmatpush1.bf16.msra.mxu0 0
        %1102 = vmatprep.subr.bf16.mxu0 0
        %1103 = vmatpush1.bf16.msra.mxu0 0
        %1104 = vmatprep.mubr.bf16.mxu0 0
        %1105 = vmatmul.mubr.bf16.gmra.mrb[0].mxu0 %v1067
        %v1106 = vpop.f32.mrb[0].mxu0
        %v1107 = vadd.f32 %v1052, %v1106
        %v1108 = vpop.f32.mrb[0].mxu0
        %v1109 = vpop.f32.mrb[0].mxu0
        %v1110 = vadd.f32 %v1052, %v1109
        %v1111 = vpop.f32.mrb[0].mxu0
        %1112 = vmatprep.mubr.bf16.mxu0 0
        %1113 = vmatmul.mubr.bf16.gmra.mrb[0].mxu0 %v1070
        %v1114 = vpop.f32.mrb[0].mxu0
        %v1115 = vadd.f32 %v1052, %v1114
        %v1116 = vpop.f32.mrb[0].mxu0
        %v1117 = vpop.f32.mrb[0].mxu0
        %v1118 = vadd.f32 %v1052, %v1117
        %v1119 = vpop.f32.mrb[0].mxu0
        %1120 = vdwg.mxu0
        %v1121 = vmul.f32 %v1107, 0.1
        %v1122 = vmul.f32 %v1110, 0.1
        %v1123 = vmul.f32 %v1115, 0.1
        %v1124 = vmul.f32 %v1118, 0.1
        %v1125 = vmax.f32 %v1107, %v1121
        %v1126 = vmax.f32 %v1110, %v1122
        %v1127 = vmax.f32 %v1115, %v1123
        %v1128 = vmax.f32 %v1118, %v1124
        %v1129 = vpack.c.bf16 %v1126, %v1125
        %v1130 = vpack.c.bf16 %v1128, %v1127
        %v1131 = vld [vmem:[%s10] sm:$0xf]
        %v1132 = vld [vmem:[%s10 + $0x4] sm:$0xf]
        %v1133 = vld [vmem:[%s10 + $0x8] sm:$0xf]
        %v1134 = vld [vmem:[%s10 + $0xc] sm:$0xf]
        %v1135 = vld [vmem:[%s11] sm:$0x1]
        %v1137 = vlaneseq
        %v1138 = vshrl.u32 %v1137, 7
        %v1139 = vsub.s32 0, %v1138
        %v1140 = vrot.slane %v1135, %v1139
        %v1146 = vunpack.c.l.b16 %v1131
        %v1147 = vunpack.c.l.b16 %v1132
        %v1148 = vunpack.c.l.b16 %v1133
        %v1149 = vunpack.c.l.b16 %v1134
        %v1150 = vpack.c.b16 %v1147, %v1146
        %v1151 = vpack.c.b16 %v1149, %v1148
        %v1155 = vsel %vm727, %v1129, 0
        %v1158 = vsel %vm727, %v1130, 0
        %1160 = vmatprep.subr.bf16.mxu0 0
        %1161 = vmatpush1.bf16.msra.mxu0 %v1150
        %1162 = vmatprep.subr.bf16.mxu0 0
        %1163 = vmatpush1.bf16.msra.mxu0 %v1151
        %1164 = vmatprep.subr.bf16.mxu0 0
        %1165 = vmatpush1.bf16.msra.mxu0 0
        %1166 = vmatprep.subr.bf16.mxu0 0
        %1167 = vmatpush1.bf16.msra.mxu0 0
        %1168 = vmatprep.subr.bf16.mxu0 0
        %1169 = vmatpush1.bf16.msra.mxu0 0
        %1170 = vmatprep.subr.bf16.mxu0 0
        %1171 = vmatpush1.bf16.msra.mxu0 0
        %1172 = vmatprep.subr.bf16.mxu0 0
        %1173 = vmatpush1.bf16.msra.mxu0 0
        %1174 = vmatprep.subr.bf16.mxu0 0
        %1175 = vmatpush1.bf16.msra.mxu0 0
        %1176 = vmatprep.subr.bf16.mxu0 0
        %1177 = vmatpush1.bf16.msra.mxu0 0
        %1178 = vmatprep.subr.bf16.mxu0 0
        %1179 = vmatpush1.bf16.msra.mxu0 0
        %1180 = vmatprep.subr.bf16.mxu0 0
        %1181 = vmatpush1.bf16.msra.mxu0 0
        %1182 = vmatprep.subr.bf16.mxu0 0
        %1183 = vmatpush1.bf16.msra.mxu0 0
        %1184 = vmatprep.subr.bf16.mxu0 0
        %1185 = vmatpush1.bf16.msra.mxu0 0
        %1186 = vmatprep.subr.bf16.mxu0 0
        %1187 = vmatpush1.bf16.msra.mxu0 0
        %1188 = vmatprep.subr.bf16.mxu0 0
        %1189 = vmatpush1.bf16.msra.mxu0 0
        %1190 = vmatprep.subr.bf16.mxu0 0
        %1191 = vmatpush1.bf16.msra.mxu0 0
        %1192 = vmatprep.mubr.bf16.mxu0 0
        %1193 = vmatmul.mubr.bf16.gmra.mrb[0].mxu0 %v1155
        %v1194 = vpop.f32.mrb[0].mxu0
        %v1195 = vadd.f32 %v1140, %v1194
        %v1196 = vpop.f32.mrb[0].mxu0
        %v1197 = vpop.f32.mrb[0].mxu0
        %v1198 = vadd.f32 %v1140, %v1197
        %v1199 = vpop.f32.mrb[0].mxu0
        %1200 = vmatprep.mubr.bf16.mxu0 0
        %1201 = vmatmul.mubr.bf16.gmra.mrb[0].mxu0 %v1158
        %v1202 = vpop.f32.mrb[0].mxu0
        %v1203 = vadd.f32 %v1140, %v1202
        %v1204 = vpop.f32.mrb[0].mxu0
        %v1205 = vpop.f32.mrb[0].mxu0
        %v1206 = vadd.f32 %v1140, %v1205
        %v1207 = vpop.f32.mrb[0].mxu0
        %1208 = vdwg.mxu0
        %v1209 = vadd.f32 %v1195, %v842
        %v1210 = vadd.f32 %v1198, %v843
        %v1211 = vadd.f32 %v1203, %v844
        %v1212 = vadd.f32 %v1206, %v845
        %v1213 = vsel %vm838, %v1209, 0.0
        %v1214 = vsel %vm839, %v1210, 0.0
        %v1215 = vsel %vm840, %v1211, 0.0
        %v1216 = vsel %vm841, %v1212, 0.0
        %1217 = vst.msk [vmem:[#allocation2 + $0x8] sm:$0xff] %vm727, %v1213
        %1218 = vst.msk [vmem:[#allocation2 + $0x10] sm:$0xff] %vm727, %v1214
        %1219 = vst.msk [vmem:[#allocation2 + $0x18] sm:$0xff] %vm727, %v1215
        %1220 = vst.msk [vmem:[#allocation2 + $0x20] sm:$0xff] %vm727, %v1216
        %s1221 = scalar_lea.vmem %s4, 8
        %v1222 = vld [vmem:[%s1221] sm:$0x7f]
        %v1223 = vlaneseq
        %v1224 = vshrl.u32 %v1223, 7
        %v1225 = vsub.s32 3, %v1224
        %v1226 = vrot.slane %v1222, %v1225
        %v1227 = vmul.f32 %v1213, %v1226
        %v1228 = vmul.f32 %v1214, %v1226
        %v1229 = vmul.f32 %v1215, %v1226
        %v1230 = vmul.f32 %v1216, %v1226
        %s1231 = scalar_lea.vmem [#allocation9], 1
        %v1232 = vld [vmem:[%s1231] sm:$0x1]
        %v1234 = vlaneseq
        %v1235 = vshrl.u32 %v1234, 7
        %v1236 = vsub.s32 0, %v1235
        %v1237 = vrot.slane %v1232, %v1236
        %v1239 = vadd.f32 %v1227, %v1237
        %v1240 = vadd.f32 %v1228, %v1237
        %v1241 = vadd.f32 %v1229, %v1237
        %v1242 = vadd.f32 %v1230, %v1237
        %v1243 = vld [vmem:[#allocation2 + $0x5] sm:$0xff]
        %v1244 = vld [vmem:[#allocation2 + $0xd] sm:$0xff]
        %v1245 = vld [vmem:[#allocation2 + $0x15] sm:$0xff]
        %v1246 = vld [vmem:[#allocation2 + $0x1d] sm:$0xff]
        %v1247 = vlaneseq
        %v1248 = vshrl.u32 %v1247, 7
        %v1249 = vsub.s32 0, %v1248
        %v1250 = vrot.slane %v1222, %v1249
        %v1251 = vmul.f32 %v1243, %v1250
        %v1252 = vmul.f32 %v1244, %v1250
        %v1253 = vmul.f32 %v1245, %v1250
        %v1254 = vmul.f32 %v1246, %v1250
        %v1255 = vadd.f32 %v1239, %v1251
        %v1256 = vadd.f32 %v1240, %v1252
        %v1257 = vadd.f32 %v1241, %v1253
        %v1258 = vadd.f32 %v1242, %v1254
        %v1259 = vld [vmem:[#allocation2 + $0x6] sm:$0xff]
        %v1260 = vld [vmem:[#allocation2 + $0xe] sm:$0xff]
        %v1261 = vld [vmem:[#allocation2 + $0x16] sm:$0xff]
        %v1262 = vld [vmem:[#allocation2 + $0x1e] sm:$0xff]
        %v1263 = vlaneseq
        %v1264 = vshrl.u32 %v1263, 7
        %v1265 = vsub.s32 1, %v1264
        %v1266 = vrot.slane %v1222, %v1265
        %v1267 = vmul.f32 %v1259, %v1266
        %v1268 = vmul.f32 %v1260, %v1266
        %v1269 = vmul.f32 %v1261, %v1266
        %v1270 = vmul.f32 %v1262, %v1266
        %v1271 = vadd.f32 %v1255, %v1267
        %v1272 = vadd.f32 %v1256, %v1268
        %v1273 = vadd.f32 %v1257, %v1269
        %v1274 = vadd.f32 %v1258, %v1270
        %v1275 = vld [vmem:[#allocation2 + $0x7] sm:$0xff]
        %v1276 = vld [vmem:[#allocation2 + $0xf] sm:$0xff]
        %v1277 = vld [vmem:[#allocation2 + $0x17] sm:$0xff]
        %v1278 = vld [vmem:[#allocation2 + $0x1f] sm:$0xff]
        %v1279 = vlaneseq
        %v1280 = vshrl.u32 %v1279, 7
        %v1281 = vsub.s32 2, %v1280
        %v1282 = vrot.slane %v1222, %v1281
        %v1283 = vmul.f32 %v1275, %v1282
        %v1284 = vmul.f32 %v1276, %v1282
        %v1285 = vmul.f32 %v1277, %v1282
        %v1286 = vmul.f32 %v1278, %v1282
        %v1287 = vadd.f32 %v1271, %v1283
        %v1288 = vadd.f32 %v1272, %v1284
        %v1289 = vadd.f32 %v1273, %v1285
        %v1290 = vadd.f32 %v1274, %v1286
        %v1291 = vld [vmem:[#allocation2 + $0x9] sm:$0xff]
        %v1292 = vld [vmem:[#allocation2 + $0x11] sm:$0xff]
        %v1293 = vld [vmem:[#allocation2 + $0x19] sm:$0xff]
        %v1294 = vld [vmem:[#allocation2 + $0x21] sm:$0xff]
        %v1295 = vlaneseq
        %v1296 = vshrl.u32 %v1295, 7
        %v1297 = vsub.s32 4, %v1296
        %v1298 = vrot.slane %v1222, %v1297
        %v1299 = vmul.f32 %v1291, %v1298
        %v1300 = vmul.f32 %v1292, %v1298
        %v1301 = vmul.f32 %v1293, %v1298
        %v1302 = vmul.f32 %v1294, %v1298
        %v1303 = vadd.f32 %v1287, %v1299
        %v1304 = vadd.f32 %v1288, %v1300
        %v1305 = vadd.f32 %v1289, %v1301
        %v1306 = vadd.f32 %v1290, %v1302
        %v1307 = vld [vmem:[#allocation2 + $0xa] sm:$0xff]
        %v1308 = vld [vmem:[#allocation2 + $0x12] sm:$0xff]
        %v1309 = vld [vmem:[#allocation2 + $0x1a] sm:$0xff]
        %v1310 = vld [vmem:[#allocation2 + $0x22] sm:$0xff]
        %v1311 = vlaneseq
        %v1312 = vshrl.u32 %v1311, 7
        %v1313 = vsub.s32 5, %v1312
        %v1314 = vrot.slane %v1222, %v1313
        %v1315 = vmul.f32 %v1307, %v1314
        %v1316 = vmul.f32 %v1308, %v1314
        %v1317 = vmul.f32 %v1309, %v1314
        %v1318 = vmul.f32 %v1310, %v1314
        %v1319 = vadd.f32 %v1303, %v1315
        %v1320 = vadd.f32 %v1304, %v1316
        %v1321 = vadd.f32 %v1305, %v1317
        %v1322 = vadd.f32 %v1306, %v1318
        %v1323 = vld [vmem:[#allocation2 + $0xb] sm:$0xff]
        %v1324 = vld [vmem:[#allocation2 + $0x13] sm:$0xff]
        %v1325 = vld [vmem:[#allocation2 + $0x1b] sm:$0xff]
        %v1326 = vld [vmem:[#allocation2 + $0x23] sm:$0xff]
        %v1327 = vlaneseq
        %v1328 = vshrl.u32 %v1327, 7
        %v1329 = vsub.s32 6, %v1328
        %v1330 = vrot.slane %v1222, %v1329
        %v1331 = vmul.f32 %v1323, %v1330
        %v1332 = vmul.f32 %v1324, %v1330
        %v1333 = vmul.f32 %v1325, %v1330
        %v1334 = vmul.f32 %v1326, %v1330
        %v1335 = vadd.f32 %v1319, %v1331
        %v1336 = vadd.f32 %v1320, %v1332
        %v1337 = vadd.f32 %v1321, %v1333
        %v1338 = vadd.f32 %v1322, %v1334
        %v1339 = vsel %vm727, %v1335, 0.0
        %1340 = vadd.xlane.f32.xlu0 %v1339
        %v1341 = vpop.xlane.xlu0 %1340
        %v1342 = vsel %vm727, %v1336, 0.0
        %1343 = vadd.xlane.f32.xlu0 %v1342
        %v1344 = vpop.xlane.xlu0 %1343
        %v1345 = vsel %vm727, %v1337, 0.0
        %1346 = vadd.xlane.f32.xlu0 %v1345
        %v1347 = vpop.xlane.xlu0 %1346
        %v1348 = vsel %vm727, %v1338, 0.0
        %1349 = vadd.xlane.f32.xlu0 %v1348
        %v1350 = vpop.xlane.xlu0 %1349
        %v1351 = vmul.f32 %v1341, %v978
        %v1352 = vmul.f32 %v1344, %v978
        %v1353 = vmul.f32 %v1347, %v978
        %v1354 = vmul.f32 %v1350, %v978
        %v1355 = vsub.f32 %v1335, %v1351
        %v1356 = vsub.f32 %v1336, %v1352
        %v1357 = vsub.f32 %v1337, %v1353
        %v1358 = vsub.f32 %v1338, %v1354
        %v1359 = vmul.f32 %v1355, %v1355
        %v1360 = vmul.f32 %v1356, %v1356
        %v1361 = vmul.f32 %v1357, %v1357
        %v1362 = vmul.f32 %v1358, %v1358
        %v1363 = vsel %vm727, %v1359, 0.0
        %1364 = vadd.xlane.f32.xlu0 %v1363
        %v1365 = vpop.xlane.xlu0 %1364
        %v1366 = vsel %vm727, %v1360, 0.0
        %1367 = vadd.xlane.f32.xlu0 %v1366
        %v1368 = vpop.xlane.xlu0 %1367
        %v1369 = vsel %vm727, %v1361, 0.0
        %1370 = vadd.xlane.f32.xlu0 %v1369
        %v1371 = vpop.xlane.xlu0 %1370
        %v1372 = vsel %vm727, %v1362, 0.0
        %1373 = vadd.xlane.f32.xlu0 %v1372
        %v1374 = vpop.xlane.xlu0 %1373
        %v1375 = vmul.f32 %v1365, %v978
        %v1376 = vmul.f32 %v1368, %v978
        %v1377 = vmul.f32 %v1371, %v978
        %v1378 = vmul.f32 %v1374, %v978
        %v1379 = vadd.f32 %v1375, 1e-05
        %v1380 = vadd.f32 %v1376, 1e-05
        %v1381 = vadd.f32 %v1377, 1e-05
        %v1382 = vadd.f32 %v1378, 1e-05
        %v1383 = vrsqrt.pop %v1379
        %v1384 = vrsqrt.pop %v1380
        %v1385 = vrsqrt.pop %v1381
        %v1386 = vrsqrt.pop %v1382
        %v1387 = vmul.f32 %v1355, %v1383
        %v1388 = vmul.f32 %v1356, %v1384
        %v1389 = vmul.f32 %v1357, %v1385
        %v1390 = vmul.f32 %v1358, %v1386
        %s1391 = scalar_lea.vmem [#allocation11], 1
        %v1392 = vld [vmem:[%s1391] sm:$0x1]
        %v1394 = vlaneseq
        %v1395 = vshrl.u32 %v1394, 7
        %v1396 = vsub.s32 0, %v1395
        %v1397 = vrot.slane %v1392, %v1396
        %v1399 = vmul.f32 %v1387, %v1397
        %v1400 = vmul.f32 %v1388, %v1397
        %v1401 = vmul.f32 %v1389, %v1397
        %v1402 = vmul.f32 %v1390, %v1397
        %s1403 = scalar_lea.vmem [#allocation12], 1
        %v1404 = vld [vmem:[%s1403] sm:$0x1]
        %v1406 = vlaneseq
        %v1407 = vshrl.u32 %v1406, 7
        %v1408 = vsub.s32 0, %v1407
        %v1409 = vrot.slane %v1404, %v1408
        %v1411 = vadd.f32 %v1399, %v1409
        %v1412 = vadd.f32 %v1400, %v1409
        %v1413 = vadd.f32 %v1401, %v1409
        %v1414 = vadd.f32 %v1402, %v1409
        %v1415 = vpack.c.bf16 %v1412, %v1411
        %v1416 = vpack.c.bf16 %v1414, %v1413
        %s1417 = scalar_lea.vmem [#allocation14], 16
        %v1418 = vld [vmem:[%s1417] sm:$0xf]
        %v1419 = vld [vmem:[%s1417 + $0x4] sm:$0xf]
        %v1420 = vld [vmem:[%s1417 + $0x8] sm:$0xf]
        %v1421 = vld [vmem:[%s1417 + $0xc] sm:$0xf]
        %s1422 = scalar_lea.vmem [#allocation15], 1
        %v1423 = vld [vmem:[%s1422] sm:$0x1]
        %v1425 = vlaneseq
        %v1426 = vshrl.u32 %v1425, 7
        %v1427 = vsub.s32 0, %v1426
        %v1428 = vrot.slane %v1423, %v1427
        %v1434 = vunpack.c.l.b16 %v1418
        %v1435 = vunpack.c.l.b16 %v1419
        %v1436 = vunpack.c.l.b16 %v1420
        %v1437 = vunpack.c.l.b16 %v1421
        %v1438 = vpack.c.b16 %v1435, %v1434
        %v1439 = vpack.c.b16 %v1437, %v1436
        %v1443 = vsel %vm727, %v1415, 0
        %v1446 = vsel %vm727, %v1416, 0
        %1448 = vmatprep.subr.bf16.mxu0 0
        %1449 = vmatpush1.bf16.msra.mxu0 %v1438
        %1450 = vmatprep.subr.bf16.mxu0 0
        %1451 = vmatpush1.bf16.msra.mxu0 %v1439
        %1452 = vmatprep.subr.bf16.mxu0 0
        %1453 = vmatpush1.bf16.msra.mxu0 0
        %1454 = vmatprep.subr.bf16.mxu0 0
        %1455 = vmatpush1.bf16.msra.mxu0 0
        %1456 = vmatprep.subr.bf16.mxu0 0
        %1457 = vmatpush1.bf16.msra.mxu0 0
        %1458 = vmatprep.subr.bf16.mxu0 0
        %1459 = vmatpush1.bf16.msra.mxu0 0
        %1460 = vmatprep.subr.bf16.mxu0 0
        %1461 = vmatpush1.bf16.msra.mxu0 0
        %1462 = vmatprep.subr.bf16.mxu0 0
        %1463 = vmatpush1.bf16.msra.mxu0 0
        %1464 = vmatprep.subr.bf16.mxu0 0
        %1465 = vmatpush1.bf16.msra.mxu0 0
        %1466 = vmatprep.subr.bf16.mxu0 0
        %1467 = vmatpush1.bf16.msra.mxu0 0
        %1468 = vmatprep.subr.bf16.mxu0 0
        %1469 = vmatpush1.bf16.msra.mxu0 0
        %1470 = vmatprep.subr.bf16.mxu0 0
        %1471 = vmatpush1.bf16.msra.mxu0 0
        %1472 = vmatprep.subr.bf16.mxu0 0
        %1473 = vmatpush1.bf16.msra.mxu0 0
        %1474 = vmatprep.subr.bf16.mxu0 0
        %1475 = vmatpush1.bf16.msra.mxu0 0
        %1476 = vmatprep.subr.bf16.mxu0 0
        %1477 = vmatpush1.bf16.msra.mxu0 0
        %1478 = vmatprep.subr.bf16.mxu0 0
        %1479 = vmatpush1.bf16.msra.mxu0 0
        %1480 = vmatprep.mubr.bf16.mxu0 0
        %1481 = vmatmul.mubr.bf16.gmra.mrb[0].mxu0 %v1443
        %v1482 = vpop.f32.mrb[0].mxu0
        %v1483 = vadd.f32 %v1428, %v1482
        %v1484 = vpop.f32.mrb[0].mxu0
        %v1485 = vpop.f32.mrb[0].mxu0
        %v1486 = vadd.f32 %v1428, %v1485
        %v1487 = vpop.f32.mrb[0].mxu0
        %1488 = vmatprep.mubr.bf16.mxu0 0
        %1489 = vmatmul.mubr.bf16.gmra.mrb[0].mxu0 %v1446
        %v1490 = vpop.f32.mrb[0].mxu0
        %v1491 = vadd.f32 %v1428, %v1490
        %v1492 = vpop.f32.mrb[0].mxu0
        %v1493 = vpop.f32.mrb[0].mxu0
        %v1494 = vadd.f32 %v1428, %v1493
        %v1495 = vpop.f32.mrb[0].mxu0
        %1496 = vdwg.mxu0
        %v1497 = vmul.f32 %v1483, 0.1
        %v1498 = vmul.f32 %v1486, 0.1
        %v1499 = vmul.f32 %v1491, 0.1
        %v1500 = vmul.f32 %v1494, 0.1
        %v1501 = vmax.f32 %v1483, %v1497
        %v1502 = vmax.f32 %v1486, %v1498
        %v1503 = vmax.f32 %v1491, %v1499
        %v1504 = vmax.f32 %v1494, %v1500
        %v1505 = vpack.c.bf16 %v1502, %v1501
        %v1506 = vpack.c.bf16 %v1504, %v1503
        %s1507 = scalar_lea.vmem %s10, 16
        %v1508 = vld [vmem:[%s1507] sm:$0xf]
        %v1509 = vld [vmem:[%s1507 + $0x4] sm:$0xf]
        %v1510 = vld [vmem:[%s1507 + $0x8] sm:$0xf]
        %v1511 = vld [vmem:[%s1507 + $0xc] sm:$0xf]
        %s1512 = scalar_lea.vmem %s11, 1
        %v1513 = vld [vmem:[%s1512] sm:$0x1]
        %v1515 = vlaneseq
        %v1516 = vshrl.u32 %v1515, 7
        %v1517 = vsub.s32 0, %v1516
        %v1518 = vrot.slane %v1513, %v1517
        %v1524 = vunpack.c.l.b16 %v1508
        %v1525 = vunpack.c.l.b16 %v1509
        %v1526 = vunpack.c.l.b16 %v1510
        %v1527 = vunpack.c.l.b16 %v1511
        %v1528 = vpack.c.b16 %v1525, %v1524
        %v1529 = vpack.c.b16 %v1527, %v1526
        %v1533 = vsel %vm727, %v1505, 0
        %v1536 = vsel %vm727, %v1506, 0
        %1538 = vmatprep.subr.bf16.mxu0 0
        %1539 = vmatpush1.bf16.msra.mxu0 %v1528
        %1540 = vmatprep.subr.bf16.mxu0 0
        %1541 = vmatpush1.bf16.msra.mxu0 %v1529
        %1542 = vmatprep.subr.bf16.mxu0 0
        %1543 = vmatpush1.bf16.msra.mxu0 0
        %1544 = vmatprep.subr.bf16.mxu0 0
        %1545 = vmatpush1.bf16.msra.mxu0 0
        %1546 = vmatprep.subr.bf16.mxu0 0
        %1547 = vmatpush1.bf16.msra.mxu0 0
        %1548 = vmatprep.subr.bf16.mxu0 0
        %1549 = vmatpush1.bf16.msra.mxu0 0
        %1550 = vmatprep.subr.bf16.mxu0 0
        %1551 = vmatpush1.bf16.msra.mxu0 0
        %1552 = vmatprep.subr.bf16.mxu0 0
        %1553 = vmatpush1.bf16.msra.mxu0 0
        %1554 = vmatprep.subr.bf16.mxu0 0
        %1555 = vmatpush1.bf16.msra.mxu0 0
        %1556 = vmatprep.subr.bf16.mxu0 0
        %1557 = vmatpush1.bf16.msra.mxu0 0
        %1558 = vmatprep.subr.bf16.mxu0 0
        %1559 = vmatpush1.bf16.msra.mxu0 0
        %1560 = vmatprep.subr.bf16.mxu0 0
        %1561 = vmatpush1.bf16.msra.mxu0 0
        %1562 = vmatprep.subr.bf16.mxu0 0
        %1563 = vmatpush1.bf16.msra.mxu0 0
        %1564 = vmatprep.subr.bf16.mxu0 0
        %1565 = vmatpush1.bf16.msra.mxu0 0
        %1566 = vmatprep.subr.bf16.mxu0 0
        %1567 = vmatpush1.bf16.msra.mxu0 0
        %1568 = vmatprep.subr.bf16.mxu0 0
        %1569 = vmatpush1.bf16.msra.mxu0 0
        %1570 = vmatprep.mubr.bf16.mxu0 0
        %1571 = vmatmul.mubr.bf16.gmra.mrb[0].mxu0 %v1533
        %v1572 = vpop.f32.mrb[0].mxu0
        %v1573 = vpop.f32.mrb[0].mxu0
        %v1574 = vpop.f32.mrb[0].mxu0
        %v1575 = vadd.f32 %v1518, %v1574
        %v1576 = vpop.f32.mrb[0].mxu0
        %1577 = vmatprep.mubr.bf16.mxu0 0
        %1578 = vmatmul.mubr.bf16.gmra.mrb[0].mxu0 %v1536
        %v1579 = vpop.f32.mrb[0].mxu0
        %v1580 = vadd.f32 %v1518, %v1579
        %v1581 = vpop.f32.mrb[0].mxu0
        %v1582 = vpop.f32.mrb[0].mxu0
        %v1583 = vpop.f32.mrb[0].mxu0
        %1584 = vdwg.mxu0
        %v1585 = vadd.f32 %v1575, %v1214
        %v1586 = vadd.f32 %v1580, %v1215
        %v1587 = vpack.c.bf16 %v1586, %v1585
        %v1588 = vld [vmem:[#allocation17] sm:$0xf]
        %v1589 = vld [vmem:[#allocation17 + $0x4] sm:$0xf]
        %v1590 = vld [vmem:[#allocation17 + $0x8] sm:$0xf]
        %v1591 = vld [vmem:[#allocation17 + $0xc] sm:$0xf]
        %v1592 = vld [vmem:[%s13] sm:$0x1]
        %v1594 = vlaneseq
        %v1595 = vshrl.u32 %v1594, 7
        %v1596 = vsub.s32 0, %v1595
        %v1597 = vrot.slane %v1592, %v1596
        %v1603 = vunpack.c.l.b16 %v1588
        %v1604 = vunpack.c.l.b16 %v1589
        %v1605 = vunpack.c.l.b16 %v1590
        %v1606 = vunpack.c.l.b16 %v1591
        %v1607 = vpack.c.b16 %v1604, %v1603
        %v1608 = vpack.c.b16 %v1606, %v1605
        %v1612 = vsel %vm727, %v1587, 0
        %1614 = vmatprep.subr.bf16.mxu0 0
        %1615 = vmatpush1.bf16.msra.mxu0 %v1607
        %1616 = vmatprep.subr.bf16.mxu0 0
        %1617 = vmatpush1.bf16.msra.mxu0 %v1608
        %1618 = vmatprep.subr.bf16.mxu0 0
        %1619 = vmatpush1.bf16.msra.mxu0 0
        %1620 = vmatprep.subr.bf16.mxu0 0
        %1621 = vmatpush1.bf16.msra.mxu0 0
        %1622 = vmatprep.subr.bf16.mxu0 0
        %1623 = vmatpush1.bf16.msra.mxu0 0
        %1624 = vmatprep.subr.bf16.mxu0 0
        %1625 = vmatpush1.bf16.msra.mxu0 0
        %1626 = vmatprep.subr.bf16.mxu0 0
        %1627 = vmatpush1.bf16.msra.mxu0 0
        %1628 = vmatprep.subr.bf16.mxu0 0
        %1629 = vmatpush1.bf16.msra.mxu0 0
        %1630 = vmatprep.subr.bf16.mxu0 0
        %1631 = vmatpush1.bf16.msra.mxu0 0
        %1632 = vmatprep.subr.bf16.mxu0 0
        %1633 = vmatpush1.bf16.msra.mxu0 0
        %1634 = vmatprep.subr.bf16.mxu0 0
        %1635 = vmatpush1.bf16.msra.mxu0 0
        %1636 = vmatprep.subr.bf16.mxu0 0
        %1637 = vmatpush1.bf16.msra.mxu0 0
        %1638 = vmatprep.subr.bf16.mxu0 0
        %1639 = vmatpush1.bf16.msra.mxu0 0
        %1640 = vmatprep.subr.bf16.mxu0 0
        %1641 = vmatpush1.bf16.msra.mxu0 0
        %1642 = vmatprep.subr.bf16.mxu0 0
        %1643 = vmatpush1.bf16.msra.mxu0 0
        %1644 = vmatprep.subr.bf16.mxu0 0
        %1645 = vmatpush1.bf16.msra.mxu0 0
        %1646 = vmatprep.mubr.bf16.mxu0 0
        %1647 = vmatmul.mubr.bf16.gmra.mrb[0].mxu0 %v1612
        %v1648 = vpop.f32.mrb[0].mxu0
        %v1649 = vadd.f32 %v1597, %v1648
        %v1650 = vpop.f32.mrb[0].mxu0
        %v1651 = vpop.f32.mrb[0].mxu0
        %v1652 = vadd.f32 %v1597, %v1651
        %v1653 = vpop.f32.mrb[0].mxu0
        %1654 = vdwg.mxu0
        %v1655 = vpack.c.bf16 %v1652, %v1649
        %v1657 = vunpack.c.l.b16 %v1655
        %v1658 = vunpack.c.h.b16 %v1655
        %v1659 = vpack.c.b16 %v1657, %v1657
        %v1660 = vpack.c.b16 %v1658, %v1658
        %1663 = vst [vmem:[%s672] sm:$0xf] %v1659
        %1664 = vst [vmem:[%s672 + $0x4] sm:$0xf] %v1660
        %v1665 = vlaneseq
        %v1666 = vand.u32 %v1665, 127
        %1667 = vmax.xlane.f32.xlu0 %v1649
        %v1668 = vpop.xlane.xlu0 %1667
        %1669 = vmax.xlane.f32.xlu0 %v1652
        %v1670 = vpop.xlane.xlu0 %1669
        %vm1671 = vcmp.eq.f32.partialorder %v1649, %v1668
        %vm1672 = vcmp.eq.f32.partialorder %v1652, %v1670
        %v1673 = vsel %vm1671, %v1666, 128
        %v1674 = vsel %vm1672, %v1666, 128
        %v1675 = vand.u32 %v1673, 65535
        %v1676 = vshra.s32 %v1673, 16
        %v1677 = vcvt.s32.f32 %v1675
        %v1678 = vcvt.s32.f32 %v1676
        %1679 = vmin.xlane.f32.xlu0 %v1678
        %v1680 = vpop.xlane.xlu0 %1679
        %vm1681 = vcmp.eq.f32.partialorder %v1678, %v1680
        %v1682 = vsel %vm1681, %v1677, inf
        %1683 = vmin.xlane.f32.xlu0 %v1682
        %v1684 = vpop.xlane.xlu0 %1683
        %v1685 = vcvt.f32.s32 %v1684
        %v1686 = vcvt.f32.s32 %v1680
        %v1687 = vshll.u32 %v1686, 16
        %v1688 = vadd.s32 %v1687, %v1685
        %v1689 = vand.u32 %v1674, 65535
        %v1690 = vshra.s32 %v1674, 16
        %v1691 = vcvt.s32.f32 %v1689
        %v1692 = vcvt.s32.f32 %v1690
        %1693 = vmin.xlane.f32.xlu0 %v1692
        %v1694 = vpop.xlane.xlu0 %1693
        %vm1695 = vcmp.eq.f32.partialorder %v1692, %v1694
        %v1696 = vsel %vm1695, %v1691, inf
        %1697 = vmin.xlane.f32.xlu0 %v1696
        %v1698 = vpop.xlane.xlu0 %1697
        %v1699 = vcvt.f32.s32 %v1698
        %v1700 = vcvt.f32.s32 %v1694
        %v1701 = vshll.u32 %v1700, 16
        %v1702 = vadd.s32 %v1701, %v1699
        %vm1703 = vcmp.eq.s32.totalorder %v1666, %v1688
        %vm1704 = vcmp.eq.s32.totalorder %v1666, %v1702
        %v1705 = vsel %vm1703, -inf, %v1649
        %v1706 = vsel %vm1704, -inf, %v1652
        %1707 = vmax.xlane.f32.xlu0 %v1705
        %v1708 = vpop.xlane.xlu0 %1707
        %1709 = vmax.xlane.f32.xlu0 %v1706
        %v1710 = vpop.xlane.xlu0 %1709
        %vm1711 = vcmp.eq.f32.partialorder %v1705, %v1708
        %vm1712 = vcmp.eq.f32.partialorder %v1706, %v1710
        %v1713 = vsel %vm1711, %v1666, 128
        %v1714 = vsel %vm1712, %v1666, 128
        %v1715 = vand.u32 %v1713, 65535
        %v1716 = vshra.s32 %v1713, 16
        %v1717 = vcvt.s32.f32 %v1715
        %v1718 = vcvt.s32.f32 %v1716
        %1719 = vmin.xlane.f32.xlu0 %v1718
        %v1720 = vpop.xlane.xlu0 %1719
        %vm1721 = vcmp.eq.f32.partialorder %v1718, %v1720
        %v1722 = vsel %vm1721, %v1717, inf
        %1723 = vmin.xlane.f32.xlu0 %v1722
        %v1724 = vpop.xlane.xlu0 %1723
        %v1725 = vcvt.f32.s32 %v1724
        %v1726 = vcvt.f32.s32 %v1720
        %v1727 = vshll.u32 %v1726, 16
        %v1728 = vadd.s32 %v1727, %v1725
        %v1729 = vand.u32 %v1714, 65535
        %v1730 = vshra.s32 %v1714, 16
        %v1731 = vcvt.s32.f32 %v1729
        %v1732 = vcvt.s32.f32 %v1730
        %1733 = vmin.xlane.f32.xlu0 %v1732
        %v1734 = vpop.xlane.xlu0 %1733
        %vm1735 = vcmp.eq.f32.partialorder %v1732, %v1734
        %v1736 = vsel %vm1735, %v1731, inf
        %1737 = vmin.xlane.f32.xlu0 %v1736
        %v1738 = vpop.xlane.xlu0 %1737
        %v1739 = vcvt.f32.s32 %v1738
        %v1740 = vcvt.f32.s32 %v1734
        %v1741 = vshll.u32 %v1740, 16
        %v1742 = vadd.s32 %v1741, %v1739
        %vm1743 = vcmp.eq.s32.totalorder %v1666, %v1728
        %vm1744 = vcmp.eq.s32.totalorder %v1666, %v1742
        %v1745 = vsel %vm1743, -inf, %v1705
        %v1746 = vsel %vm1744, -inf, %v1706
        %1747 = vmax.xlane.f32.xlu0 %v1745
        %v1748 = vpop.xlane.xlu0 %1747
        %1749 = vmax.xlane.f32.xlu0 %v1746
        %v1750 = vpop.xlane.xlu0 %1749
        %vm1751 = vcmp.eq.f32.partialorder %v1745, %v1748
        %vm1752 = vcmp.eq.f32.partialorder %v1746, %v1750
        %v1753 = vsel %vm1751, %v1666, 128
        %v1754 = vsel %vm1752, %v1666, 128
        %v1755 = vand.u32 %v1753, 65535
        %v1756 = vshra.s32 %v1753, 16
        %v1757 = vcvt.s32.f32 %v1755
        %v1758 = vcvt.s32.f32 %v1756
        %1759 = vmin.xlane.f32.xlu0 %v1758
        %v1760 = vpop.xlane.xlu0 %1759
        %vm1761 = vcmp.eq.f32.partialorder %v1758, %v1760
        %v1762 = vsel %vm1761, %v1757, inf
        %1763 = vmin.xlane.f32.xlu0 %v1762
        %v1764 = vpop.xlane.xlu0 %1763
        %v1765 = vcvt.f32.s32 %v1764
        %v1766 = vcvt.f32.s32 %v1760
        %v1767 = vshll.u32 %v1766, 16
        %v1768 = vadd.s32 %v1767, %v1765
        %v1769 = vand.u32 %v1754, 65535
        %v1770 = vshra.s32 %v1754, 16
        %v1771 = vcvt.s32.f32 %v1769
        %v1772 = vcvt.s32.f32 %v1770
        %1773 = vmin.xlane.f32.xlu0 %v1772
        %v1774 = vpop.xlane.xlu0 %1773
        %vm1775 = vcmp.eq.f32.partialorder %v1772, %v1774
        %v1776 = vsel %vm1775, %v1771, inf
        %1777 = vmin.xlane.f32.xlu0 %v1776
        %v1778 = vpop.xlane.xlu0 %1777
        %v1779 = vcvt.f32.s32 %v1778
        %v1780 = vcvt.f32.s32 %v1774
        %v1781 = vshll.u32 %v1780, 16
        %v1782 = vadd.s32 %v1781, %v1779
        %vm1783 = vcmp.eq.s32.totalorder %v1666, %v1768
        %vm1784 = vcmp.eq.s32.totalorder %v1666, %v1782
        %v1785 = vsel %vm1783, -inf, %v1745
        %v1786 = vsel %vm1784, -inf, %v1746
        %1787 = vmax.xlane.f32.xlu0 %v1785
        %v1788 = vpop.xlane.xlu0 %1787
        %1789 = vmax.xlane.f32.xlu0 %v1786
        %v1790 = vpop.xlane.xlu0 %1789
        %vm1791 = vcmp.eq.f32.partialorder %v1785, %v1788
        %vm1792 = vcmp.eq.f32.partialorder %v1786, %v1790
        %v1793 = vsel %vm1791, %v1666, 128
        %v1794 = vsel %vm1792, %v1666, 128
        %v1795 = vand.u32 %v1793, 65535
        %v1796 = vshra.s32 %v1793, 16
        %v1797 = vcvt.s32.f32 %v1795
        %v1798 = vcvt.s32.f32 %v1796
        %1799 = vmin.xlane.f32.xlu0 %v1798
        %v1800 = vpop.xlane.xlu0 %1799
        %vm1801 = vcmp.eq.f32.partialorder %v1798, %v1800
        %v1802 = vsel %vm1801, %v1797, inf
        %1803 = vmin.xlane.f32.xlu0 %v1802
        %v1804 = vpop.xlane.xlu0 %1803
        %v1805 = vcvt.f32.s32 %v1804
        %v1806 = vcvt.f32.s32 %v1800
        %v1807 = vshll.u32 %v1806, 16
        %v1808 = vadd.s32 %v1807, %v1805
        %v1809 = vand.u32 %v1794, 65535
        %v1810 = vshra.s32 %v1794, 16
        %v1811 = vcvt.s32.f32 %v1809
        %v1812 = vcvt.s32.f32 %v1810
        %1813 = vmin.xlane.f32.xlu0 %v1812
        %v1814 = vpop.xlane.xlu0 %1813
        %vm1815 = vcmp.eq.f32.partialorder %v1812, %v1814
        %v1816 = vsel %vm1815, %v1811, inf
        %1817 = vmin.xlane.f32.xlu0 %v1816
        %v1818 = vpop.xlane.xlu0 %1817
        %v1819 = vcvt.f32.s32 %v1818
        %v1820 = vcvt.f32.s32 %v1814
        %v1821 = vshll.u32 %v1820, 16
        %v1822 = vadd.s32 %v1821, %v1819
        %v1823 = vsub.f32 %v1708, %v1668
        %v1824 = vsub.f32 %v1710, %v1670
        %v1825 = vmul.f32 %v1823, 1.442695
        %v1826 = vpow.pop %v1825
        %v1827 = vmul.f32 %v1824, 1.442695
        %v1828 = vpow.pop %v1827
        %v1829 = vsub.f32 %v1748, %v1668
        %v1830 = vsub.f32 %v1750, %v1670
        %v1831 = vmul.f32 %v1829, 1.442695
        %v1832 = vpow.pop %v1831
        %v1833 = vmul.f32 %v1830, 1.442695
        %v1834 = vpow.pop %v1833
        %v1835 = vsub.f32 %v1788, %v1668
        %v1836 = vsub.f32 %v1790, %v1670
        %v1837 = vmul.f32 %v1835, 1.442695
        %v1838 = vpow.pop %v1837
        %v1839 = vmul.f32 %v1836, 1.442695
        %v1840 = vpow.pop %v1839
        %v1841 = vadd.f32 %v1826, 1.0
        %v1842 = vadd.f32 %v1828, 1.0
        %v1843 = vadd.f32 %v1841, %v1832
        %v1844 = vadd.f32 %v1842, %v1834
        %v1845 = vadd.f32 %v1843, %v1838
        %v1846 = vadd.f32 %v1844, %v1840
        %v1847 = vcvt.s32.f32 %v1688
        %v1848 = vcvt.s32.f32 %v1702
        %v1849 = vmul.f32 %v1847, 0.014440566
        %v1850 = vmul.f32 %v1848, 0.014440566
        %v1851 = vmul.f32 %v1849, 1.442695
        %v1852 = vpow.pop %v1851
        %v1853 = vmul.f32 %v1850, 1.442695
        %v1854 = vpow.pop %v1853
        %v1855 = vmul.f32 %v1852, 20.0
        %v1856 = vmul.f32 %v1854, 20.0
        %vm1857 = vcmp.le.f32.partialorder %v1855, 20.0
        %vm1858 = vcmp.le.f32.partialorder %v1856, 20.0
        %v1859 = vsel %vm1857, 0.0, %v1855
        %v1860 = vsel %vm1858, 0.0, %v1856
        %v1861 = vadd.f32 %v1859, 0.0
        %v1862 = vadd.f32 %v1860, 0.0
        %v1863 = vcvt.s32.f32 %v1728
        %v1864 = vcvt.s32.f32 %v1742
        %v1865 = vmul.f32 %v1863, 0.014440566
        %v1866 = vmul.f32 %v1864, 0.014440566
        %v1867 = vmul.f32 %v1865, 1.442695
        %v1868 = vpow.pop %v1867
        %v1869 = vmul.f32 %v1866, 1.442695
        %v1870 = vpow.pop %v1869
        %v1871 = vmul.f32 %v1868, 20.0
        %v1872 = vmul.f32 %v1870, 20.0
        %vm1873 = vcmp.le.f32.partialorder %v1871, 20.0
        %vm1874 = vcmp.le.f32.partialorder %v1872, 20.0
        %v1875 = vsel %vm1873, 0.0, %v1871
        %v1876 = vsel %vm1874, 0.0, %v1872
        %v1877 = vmul.f32 %v1826, %v1875
        %v1878 = vmul.f32 %v1828, %v1876
        %v1879 = vadd.f32 %v1861, %v1877
        %v1880 = vadd.f32 %v1862, %v1878
        %v1881 = vcvt.s32.f32 %v1768
        %v1882 = vcvt.s32.f32 %v1782
        %v1883 = vmul.f32 %v1881, 0.014440566
        %v1884 = vmul.f32 %v1882, 0.014440566
        %v1885 = vmul.f32 %v1883, 1.442695
        %v1886 = vpow.pop %v1885
        %v1887 = vmul.f32 %v1884, 1.442695
        %v1888 = vpow.pop %v1887
        %v1889 = vmul.f32 %v1886, 20.0
        %v1890 = vmul.f32 %v1888, 20.0
        %vm1891 = vcmp.le.f32.partialorder %v1889, 20.0
        %vm1892 = vcmp.le.f32.partialorder %v1890, 20.0
        %v1893 = vsel %vm1891, 0.0, %v1889
        %v1894 = vsel %vm1892, 0.0, %v1890
        %v1895 = vmul.f32 %v1832, %v1893
        %v1896 = vmul.f32 %v1834, %v1894
        %v1897 = vadd.f32 %v1879, %v1895
        %v1898 = vadd.f32 %v1880, %v1896
        %v1899 = vcvt.s32.f32 %v1808
        %v1900 = vcvt.s32.f32 %v1822
        %v1901 = vmul.f32 %v1899, 0.014440566
        %v1902 = vmul.f32 %v1900, 0.014440566
        %v1903 = vmul.f32 %v1901, 1.442695
        %v1904 = vpow.pop %v1903
        %v1905 = vmul.f32 %v1902, 1.442695
        %v1906 = vpow.pop %v1905
        %v1907 = vmul.f32 %v1904, 20.0
        %v1908 = vmul.f32 %v1906, 20.0
        %vm1909 = vcmp.le.f32.partialorder %v1907, 20.0
        %vm1910 = vcmp.le.f32.partialorder %v1908, 20.0
        %v1911 = vsel %vm1909, 0.0, %v1907
        %v1912 = vsel %vm1910, 0.0, %v1908
        %v1913 = vmul.f32 %v1838, %v1911
        %v1914 = vmul.f32 %v1840, %v1912
        %v1915 = vadd.f32 %v1897, %v1913
        %v1916 = vadd.f32 %v1898, %v1914
        %v1917 = vrcp.pop %v1845
        %v1918 = vmul.f32 %v1915, %v1917
        %v1919 = vrcp.pop %v1846
        %v1920 = vmul.f32 %v1916, %v1919
        %vm1921 = vcmp.le.f32.partialorder %v1918, 20.0
        %vm1922 = vcmp.le.f32.partialorder %v1920, 20.0
        %v1923 = vsel %vm1921, 0.0, %v1918
        %v1924 = vsel %vm1922, 0.0, %v1920
        %vm1925 = vcmask 64512
        %1926 = vst.msk [vmem:[%s701] sm:$0xff] %vm1925, %v1923
        %1927 = vst.msk [vmem:[%s701 + $0x8] sm:$0xff] %vm1925, %v1924
        %s1928 = sand.u32 %s367, 1
        %s1929 = scalar_lea.sflag [#allocation5], %s1928
        %s1930 = sand.u32 %s367, 1
        %s1931 = smul.addr %s1930, 8
        %s1932 = scalar_lea.vmem [#allocation18], %s1931
        %p1933 = scmp.lt.s32.totalorder %s41, 1
        %s1934 = scalar_select %p1933, %s41, 1
        %p1935 = scmp.lt.s32.totalorder %s42, 0
        %s1936 = scalar_select %p1935, %s42, 0
        %s1937 = smul.addr %s1936, 2
        %s1938 = smul.addr %s1934, 2
        %s1939 = sadd.s32 %s1937, %s1938
        %s1940 = smul.addr %s1939, 8
        %s1941 = scalar_lea.vmem %s15, %s1940
        // Predicated region
        $region113: #{tpu_custom_call.1} parent=75 // pred_check
          %p1942 = pneg %p377
        $region114: #{tpu_custom_call.1} parent=75 // pred_check_branch
          %1944 = sbr.rel (%p1942) target = $region116
        $region115: #{tpu_custom_call.1} parent=75 // pred_region
          %s1946 = ssub.s32 128, 128
          %1947 = vsyncadd %s1929, %s1946
          %s1948 = smul.addr %s42, 2
          %s1949 = smul.addr %s41, 2
          %s1950 = sadd.s32 %s1948, %s1949
          %s1951 = smul.addr %s1950, 64
          %s1952 = scalar_lea.hbm %s14, %s1951
          %s1953 = sshll.u32 %s1932, 4
          %s1954 = int_to_ptr.vmem [resolvable:$true] %s1953
          %1959 = dma.vmem_to_hbm [thread:$0]  %s1954, 128, %s1952, %s1929, 64, 64, 4
        $region116: #{tpu_custom_call.1} parent=75 // pred_fallthru
          _
        // Predicated region
        $region117: #{tpu_custom_call.1} parent=75 // pred_check
          %p1960 = pneg %p405
        $region118: #{tpu_custom_call.1} parent=75 // pred_check_branch
          %1962 = sbr.rel (%p1960) target = $region120
        $region119: #{tpu_custom_call.1} parent=75 // pred_region
          _
        $region120: #{tpu_custom_call.1} parent=75 // pred_fallthru
          _
      $region76: #{tpu_custom_call.1} parent=5 // pred_fallthru
        _
      %p1963 = scmp.le.s32.totalorder 2, %s32
      // Predicated region
      $region121: #{tpu_custom_call.1} parent=5 // pred_check
        %p1964 = pneg %p1963
      $region122: #{tpu_custom_call.1} parent=5 // pred_check_branch
        %1966 = sbr.rel (%p1964) target = $region124
      $region123: #{tpu_custom_call.1} parent=5 // pred_region
        %s1967 = ssub.s32 %s32, 2
        // Predicated region
        $region125: #{tpu_custom_call.1} parent=123 // pred_check
          %p1968 = pneg %p383
        $region126: #{tpu_custom_call.1} parent=123 // pred_check_branch
          %1970 = sbr.rel (%p1968) target = $region128
        $region127: #{tpu_custom_call.1} parent=123 // pred_region
          %s1971 = sand.u32 %s368, 1
          %s1972 = scalar_lea.sflag [#allocation5], %s1971
          %s1973 = sand.u32 %s368, 1
          %s1974 = smul.addr %s1973, 8
          %s1975 = scalar_lea.vmem [#allocation18], %s1974
          %1976 = dma.done %s1972, 128
        $region128: #{tpu_custom_call.1} parent=123 // pred_fallthru
          _
        // Predicated region
        $region129: #{tpu_custom_call.1} parent=123 // pred_check
          %p1977 = pneg %p411
        $region130: #{tpu_custom_call.1} parent=123 // pred_check_branch
          %1979 = sbr.rel (%p1977) target = $region132
        $region131: #{tpu_custom_call.1} parent=123 // pred_region
          %p1980 = scmp.lt.s32.totalorder %s43, 1
          %s1981 = scalar_select %p1980, %s43, 1
          %p1982 = scmp.lt.s32.totalorder %s44, 0
          %s1983 = scalar_select %p1982, %s44, 0
          %s1984 = smul.addr %s1983, 2
          %s1985 = smul.addr %s1981, 2
          %s1986 = sadd.s32 %s1984, %s1985
          %s1987 = smul.addr %s1986, 8
          %s1988 = scalar_lea.vmem %s15, %s1987
        $region132: #{tpu_custom_call.1} parent=123 // pred_fallthru
          _
      $region124: #{tpu_custom_call.1} parent=5 // pred_fallthru
        _
    $region6: #{tpu_custom_call.1} parent=1 // loop_footer
      %s36 = sadd.s32 1, %s32
    $region7: #{tpu_custom_call.1} parent=1 // loop_footer_branch
      %31 = sbr.rel target = $region3
    $region8: #{tpu_custom_call.1} parent=1 // loop_exit
      _
    %1989 = vsyncpa [#allocation4], 1
    %s1990 = scalar_lea.sflag [#allocation4], 1
    %1991 = vsyncpa %s1990, 1
    %1992 = vsyncpa [#allocation7], 1
    %1993 = vsyncpa [#allocation10], 1
    %1994 = vsyncpa [#allocation13], 1
    %1995 = vsyncpa [#allocation16], 1
    %1996 = vsyncpa [#allocation5], 1
    %s1997 = scalar_lea.sflag [#allocation5], 1
    %1998 = vsyncpa %s1997, 1

</llo_original>
